<compile_context>
chip_gen: v7x
topology: tpu7x:2x2x1
jax: 0.10.0
libtpu: 0.0.40
codegen_flags: <defaults>
</compile_context>

<pallas_src>
import functools

import jax
import jax.numpy as jnp
import numpy as np
from jax import lax
from jax.experimental import pallas as pl
from jax.experimental.pallas import tpu as pltpu


def _fused_lstm_kernel(*refs, n_layers, t_chunk, batch, hid, unroll):
    """One grid step = one (batch-split, time-chunk) tile, all layers.

    refs = [x,
            w_ih_0, w_hh_0, b_0, ..., w_ih_{L-1}, w_hh_{L-1}, b_{L-1},   # in
            out, h_final, c_final,                                       # out
            gin_sc, seq_sc, h_st, c_st]                                  # scratch
    """
    L, Tc, Bc, H = n_layers, t_chunk, batch, hid
    n_w = 3 * L
    x_ref = refs[0]
    w_refs = refs[1:1 + n_w]
    out_ref, h_out_ref, c_out_ref = refs[1 + n_w:4 + n_w]
    gin_sc, seq_sc, h_st, c_st = refs[4 + n_w:]

    chunk = pl.program_id(1)

    # Zero the carried recurrent state at the first time-chunk of each
    # batch split.  (h_st / c_st persist across grid steps.)
    @pl.when(chunk == 0)
    def _():
        h_st[...] = jnp.zeros_like(h_st)
        c_st[...] = jnp.zeros_like(c_st)

    # Layer-0 input slab for this chunk.  Merging (Tc, Bc) -> (Tc*Bc) is
    # layout-free in f32 because Bc is a multiple of the 8-row sublane tile.
    x_slab = x_ref[...].reshape(Tc * Bc, x_ref.shape[-1])

    for layer in range(L):
        w_ih = w_refs[3 * layer][...]          # bf16, i/f/o cols pre-scaled 0.5
        w_hh = w_refs[3 * layer + 1][...]      # bf16, i/f/o cols pre-scaled 0.5
        b = w_refs[3 * layer + 2][...]         # f32,  i/f/o cols pre-scaled 0.5

        # Hoisted input projection: ONE bf16 MXU matmul covering every
        # timestep of the chunk, bias folded in (removed from the hot path).
        gin = jnp.dot(x_slab.astype(jnp.bfloat16), w_ih,
                      preferred_element_type=jnp.float32) + b
        gin_sc[...] = gin.reshape(Tc, Bc, 4 * H)

        # Last layer writes its hidden sequence straight into the output
        # block; earlier layers stage it in VMEM for the next layer.
        dst = out_ref if layer == L - 1 else seq_sc

        def step(t, carry, w_hh=w_hh, dst=dst):
            h, c = carry
            # i/f/o pre-activations arrive pre-scaled by 0.5 (folded into the
            # weights), so a single EUP tanh over the lane-dense (Bc, 4H)
            # gate vreg gives all four nonlinearities:
            #   sigmoid(x) = 0.5 * (tanh(0.5 x) + 1)   for i, f, o
            #   tanh(x)                                 for g
            # TODO(synk): weight-stationary W_hh via pltpu.matmul_push_rhs /
            #             matmul_acc_lhs / matmul_pop to shorten the serial
            #             h->h MXU chain (needs staging-reg shape handling).
            gates = gin_sc[t] + jnp.dot(h.astype(jnp.bfloat16), w_hh,
                                        preferred_element_type=jnp.float32)
            t_all = jnp.tanh(gates)
            i_g = 0.5 * (t_all[:, 0 * H:1 * H] + 1.0)
            f_g = 0.5 * (t_all[:, 1 * H:2 * H] + 1.0)
            g_g = t_all[:, 2 * H:3 * H]
            o_g = 0.5 * (t_all[:, 3 * H:4 * H] + 1.0)
            c_new = f_g * c + i_g * g_g
            h_new = o_g * jnp.tanh(c_new)
            # TODO(synk): pack 4 timesteps into the 128-lane dim for a fully
            #             lane-dense store (this one is lane-masked at H=32).
            dst[t] = h_new.astype(dst.dtype)
            return h_new, c_new

        h_T, c_T = lax.fori_loop(0, Tc, step, (h_st[layer], c_st[layer]),
                                 unroll=unroll)

        # Persist carried state for the next time-chunk (one write per layer
        # per chunk, outside the hot loop).
        h_st[layer] = h_T
        c_st[layer] = c_T

        if layer < L - 1:
            # Next layer consumes this layer's hidden sequence from VMEM.
            x_slab = seq_sc[...].reshape(Tc * Bc, H)

    # Final (h, c) for every layer, emitted once at the last time-chunk.
    @pl.when(chunk == pl.num_programs(1) - 1)
    def _():
        h_out_ref[...] = h_st[...].astype(h_out_ref.dtype)
        c_out_ref[...] = c_st[...].astype(c_out_ref.dtype)


def _fused_lstm(x_p, flat_weights, n_layers, hid, t_chunk, n_bsplit):
    """x_p: (T, Bp, D) batch-padded f32 input.  Returns (out (T,Bp,H),
    h_final (L,Bp,H), c_final (L,Bp,H))."""
    T, Bp, D = x_p.shape
    H, L = hid, n_layers
    Tc = t_chunk
    n_chunks = T // Tc
    Bc = Bp // n_bsplit

    out_shapes = (
        jax.ShapeDtypeStruct((T, Bp, H), jnp.float32),   # last-layer hidden seq
        jax.ShapeDtypeStruct((L, Bp, H), jnp.float32),   # final h per layer
        jax.ShapeDtypeStruct((L, Bp, H), jnp.float32),   # final c per layer
    )

    def full(shape):
        nd = len(shape)
        return pl.BlockSpec(tuple(shape), lambda b, c, _nd=nd: (0,) * _nd)

    # TODO(synk): weights are revisited every grid step -> single-buffer them
    #             (pipeline_mode=pl.Buffered(1)) / set vmem_limit_bytes when
    #             production sizes approach the scoped-VMEM defaults.
    in_specs = ([pl.BlockSpec((Tc, Bc, D), lambda b, c: (c, b, 0))]
                + [full(w.shape) for w in flat_weights])
    out_specs = [
        pl.BlockSpec((Tc, Bc, H), lambda b, c: (c, b, 0)),
        pl.BlockSpec((L, Bc, H), lambda b, c: (0, b, 0)),
        pl.BlockSpec((L, Bc, H), lambda b, c: (0, b, 0)),
    ]
    scratch_shapes = [
        pltpu.VMEM((Tc, Bc, 4 * H), jnp.float32),   # x@W_ih + b slab (per chunk)
        pltpu.VMEM((Tc, Bc, H), jnp.float32),       # inter-layer hidden sequence
        pltpu.VMEM((L, Bc, H), jnp.float32),        # carried h state (all layers)
        pltpu.VMEM((L, Bc, H), jnp.float32),        # carried c state (all layers)
    ]

    # Full unroll only while the chunk and the per-core batch tile are small;
    # otherwise cap it to keep live (Bc, 4H) gate tensors inside 64 vregs.
    unroll = True if (Tc <= 32 and Bc <= 16) else min(8, Tc)

    kernel = functools.partial(
        _fused_lstm_kernel, n_layers=L, t_chunk=Tc, batch=Bc, hid=H,
        unroll=unroll)

    return pl.pallas_call(
        kernel,
        out_shape=out_shapes,
        grid_spec=pltpu.PrefetchScalarGridSpec(
            num_scalar_prefetch=0,
            grid=(n_bsplit, n_chunks),
            in_specs=in_specs,
            out_specs=out_specs,
            scratch_shapes=scratch_shapes,
        ),
        compiler_params=pltpu.CompilerParams(
            dimension_semantics=("parallel", "arbitrary")),
    )(x_p, *flat_weights)


def _prep_weights(params, hid):
    """Fold the sigmoid 0.5 pre-scale into the i/f/o gate columns (exact:
    power-of-two scale) and cast the matmul weights to bf16 (MXU-native
    operand dtype); the bias stays f32 (it is added to the f32 accumulator)."""
    H = hid
    scale = jnp.concatenate([
        jnp.full((2 * H,), 0.5, jnp.float32),   # i, f
        jnp.ones((H,), jnp.float32),            # g
        jnp.full((H,), 0.5, jnp.float32),       # o
    ])
    flat = []
    for (w_ih, w_hh, b) in params:
        flat.append((w_ih * scale).astype(jnp.bfloat16))
        flat.append((w_hh * scale).astype(jnp.bfloat16))
        flat.append((b * scale).astype(jnp.float32))
    return flat


def _largest_divisor_leq(n, cap):
    for d in range(min(n, max(cap, 1)), 0, -1):
        if n % d == 0:
            return d
    return n


@functools.partial(jax.jit, static_argnames=("t_chunk_cap", "n_tc_splits"))
def rnn_compartment_forward(x, params, t_chunk_cap=64, n_tc_splits=1):
    """Forward of Rnn_compartment (input dropout is identity, p=0.0 config).

    x: (T, B, input_dim); params: list of (w_ih (D_in,4H), w_hh (H,4H), b (1,4H)).
    n_tc_splits=2 splits the batch across v7x's two TensorCores (keep 1 on
    1-TC chips: a serial batch split only lengthens the recurrence).
    Returns (outputs (T,B,H), hidden (L,B,H), cell (L,B,H)).
    TODO(synk): training-mode dropout (p>0) would need pltpu.prng_* masking.
    """
    T, B, _ = x.shape
    H = params[0][1].shape[0]
    L = len(params)

    Bp = ((B + 7) // 8) * 8                       # pad batch to the sublane tile
    nb = n_tc_splits if (n_tc_splits >= 1 and Bp % (8 * n_tc_splits) == 0) else 1
    x_p = x if Bp == B else jnp.pad(x, ((0, 0), (0, Bp - B), (0, 0)))

    # TODO(synk): pad T (with masked final-state handling) instead of
    #             requiring a divisor when T is awkward at production sizes.
    t_chunk = _largest_divisor_leq(T, t_chunk_cap)

    flat = _prep_weights(params, H)
    out, h, c = _fused_lstm(x_p, flat, L, H, t_chunk, nb)
    return out[:, :B, :], h[:, :B, :], c[:, :B, :]


def init_params(key, input_dim, hid_dim, n_layers):
    """Deterministic init matching PyTorch LSTM parameter shapes
    (stored transposed: (in, 4H) / (H, 4H); biases pre-summed)."""
    params = []
    bound = 1.0 / np.sqrt(hid_dim)
    for layer in range(n_layers):
        d_in = input_dim if layer == 0 else hid_dim
        key, k1, k2, k3, k4 = jax.random.split(key, 5)
        w_ih = jax.random.uniform(k1, (d_in, 4 * hid_dim), jnp.float32, -bound, bound)
        w_hh = jax.random.uniform(k2, (hid_dim, 4 * hid_dim), jnp.float32, -bound, bound)
        b_ih = jax.random.uniform(k3, (4 * hid_dim,), jnp.float32, -bound, bound)
        b_hh = jax.random.uniform(k4, (4 * hid_dim,), jnp.float32, -bound, bound)
        params.append((w_ih, w_hh, (b_ih + b_hh)[None, :]))
    return params


def _reference_forward(x, params):
    """Pure-JAX f32 reference (lax.scan) with PyTorch LSTM semantics."""
    def one_layer(xs, w_ih, w_hh, b):
        B = xs.shape[1]
        H = w_hh.shape[0]

        def step(carry, x_t):
            h, c = carry
            gates = x_t @ w_ih + h @ w_hh + b
            i, f, g, o = jnp.split(gates, 4, axis=-1)
            c_new = jax.nn.sigmoid(f) * c + jax.nn.sigmoid(i) * jnp.tanh(g)
            h_new = jax.nn.sigmoid(o) * jnp.tanh(c_new)
            return (h_new, c_new), h_new

        init = (jnp.zeros((B, H), xs.dtype), jnp.zeros((B, H), xs.dtype))
        (hT, cT), outs = jax.lax.scan(step, init, xs)
        return outs, hT, cT

    layer_in = x
    hs, cs = [], []
    outs = None
    for (w_ih, w_hh, b) in params:
        outs, hT, cT = one_layer(layer_in, w_ih, w_hh, b)
        hs.append(hT)
        cs.append(cT)
        layer_in = outs
    return outs, jnp.stack(hs), jnp.stack(cs)


def _check(got, ref):
    # bf16 MXU operands (f32 accumulation / f32 state) -> ~1e-2-level
    # deviation from the pure-f32 reference.
    for g, r in zip(got, ref):
        np.testing.assert_allclose(np.asarray(g), np.asarray(r),
                                   atol=2.5e-2, rtol=2.5e-2)


if __name__ == "__main__":
    # Shapes consistent with the module's forward:
    #   input_x: (seq, batch, input_dim), hid_dim=32, n_layers=2, dropout=0.0
    seq, input_dim, hid_dim, n_layers = 8, 16, 32, 2
    key = jax.random.PRNGKey(0)
    key, kx1, kx2 = jax.random.split(key, 3)
    params = init_params(key, input_dim, hid_dim, n_layers)

    # Case 1: batch=4 (one batch tile), two time-chunks -> exercises the
    # chunked grid and the carried h/c state across grid steps.
    x1 = jax.random.normal(kx1, (seq, 4, input_dim), dtype=jnp.float32)
    res1 = jax.block_until_ready(
        rnn_compartment_forward(x1, params, t_chunk_cap=4))
    out1, h1, c1 = res1
    assert out1.shape == (seq, 4, hid_dim)
    assert h1.shape == (n_layers, 4, hid_dim)
    assert c1.shape == (n_layers, 4, hid_dim)
    _check(res1, _reference_forward(x1, params))

    # Case 2: batch=16 with 2 batch splits -> exercises the leading
    # "parallel" grid axis (both TensorCores on v7x; serial on 1-TC chips).
    x2 = jax.random.normal(kx2, (seq, 16, input_dim), dtype=jnp.float32)
    res2 = jax.block_until_ready(
        rnn_compartment_forward(x2, params, t_chunk_cap=8, n_tc_splits=2))
    out2, h2, c2 = res2
    assert out2.shape == (seq, 16, hid_dim)
    assert h2.shape == (n_layers, 16, hid_dim)
    assert c2.shape == (n_layers, 16, hid_dim)
    _check(res2, _reference_forward(x2, params))

    print("KERNEL_OK")
</pallas_src>

<mosaic_0001>
module attributes {stable_mosaic.version = 11 : i64} {
  func.func @_fused_lstm_kernel(%arg0: i32, %arg1: i32, %arg2: memref<4x8x16xf32, #tpu.memory_space<vmem>>, %arg3: memref<16x128xbf16, #tpu.memory_space<vmem>>, %arg4: memref<32x128xbf16, #tpu.memory_space<vmem>>, %arg5: memref<1x128xf32, #tpu.memory_space<vmem>>, %arg6: memref<32x128xbf16, #tpu.memory_space<vmem>>, %arg7: memref<32x128xbf16, #tpu.memory_space<vmem>>, %arg8: memref<1x128xf32, #tpu.memory_space<vmem>>, %arg9: memref<4x8x32xf32, #tpu.memory_space<vmem>>, %arg10: memref<2x8x32xf32, #tpu.memory_space<vmem>>, %arg11: memref<2x8x32xf32, #tpu.memory_space<vmem>>, %arg12: memref<4x8x128xf32, #tpu.memory_space<vmem>>, %arg13: memref<4x8x32xf32, #tpu.memory_space<vmem>>, %arg14: memref<2x8x32xf32, #tpu.memory_space<vmem>>, %arg15: memref<2x8x32xf32, #tpu.memory_space<vmem>>) attributes {dimension_semantics = [#tpu.dimension_semantics<parallel>, #tpu.dimension_semantics<arbitrary>], iteration_bounds = array<i64: 1, 2>, scalar_prefetch = 0 : i64, scratch_operands = 4 : i64, tpu.core_type = #tpu.core_type<tc>, window_params = [{transform_indices = @transform_0, window_bounds = array<i64: 4, 8, 16>}, {pipeline_mode = #tpu.pipeline_mode<synchronous>, transform_indices = @transform_1, window_bounds = array<i64: 16, 128>}, {pipeline_mode = #tpu.pipeline_mode<synchronous>, transform_indices = @transform_2, window_bounds = array<i64: 32, 128>}, {pipeline_mode = #tpu.pipeline_mode<synchronous>, transform_indices = @transform_3, window_bounds = array<i64: 1, 128>}, {pipeline_mode = #tpu.pipeline_mode<synchronous>, transform_indices = @transform_4, window_bounds = array<i64: 32, 128>}, {pipeline_mode = #tpu.pipeline_mode<synchronous>, transform_indices = @transform_5, window_bounds = array<i64: 32, 128>}, {pipeline_mode = #tpu.pipeline_mode<synchronous>, transform_indices = @transform_6, window_bounds = array<i64: 1, 128>}, {transform_indices = @transform_7, window_bounds = array<i64: 4, 8, 32>}, {transform_indices = @transform_8, window_bounds = array<i64: 2, 8, 32>}, {transform_indices = @transform_9, window_bounds = array<i64: 2, 8, 32>}]} {
    %c0_i32 = arith.constant 0 : i32
    %0 = arith.cmpi eq, %arg1, %c0_i32 : i32
    %1 = arith.extui %0 : i1 to i32
    %c0_i32_0 = arith.constant 0 : i32
    %2 = arith.cmpi ne, %1, %c0_i32_0 : i32
    scf.if %2 {
      %cst_144 = arith.constant 0.000000e+00 : f32
      %304 = vector.broadcast %cst_144 : f32 to vector<2x8x32xf32>
      %c0_145 = arith.constant 0 : index
      %c0_146 = arith.constant 0 : index
      %c0_147 = arith.constant 0 : index
      %305 = vector.load %arg14[%c0_145, %c0_146, %c0_147] : memref<2x8x32xf32, #tpu.memory_space<vmem>>, vector<2x8x32xf32>
      tpu.vector_store %arg14[%c0_145, %c0_146, %c0_147], %304 {strides = array<i32>} : memref<2x8x32xf32, #tpu.memory_space<vmem>>, vector<2x8x32xf32>,
      %cst_148 = arith.constant 0.000000e+00 : f32
      %306 = vector.broadcast %cst_148 : f32 to vector<2x8x32xf32>
      %c0_149 = arith.constant 0 : index
      %c0_150 = arith.constant 0 : index
      %c0_151 = arith.constant 0 : index
      %307 = vector.load %arg15[%c0_149, %c0_150, %c0_151] : memref<2x8x32xf32, #tpu.memory_space<vmem>>, vector<2x8x32xf32>
      tpu.vector_store %arg15[%c0_149, %c0_150, %c0_151], %306 {strides = array<i32>} : memref<2x8x32xf32, #tpu.memory_space<vmem>>, vector<2x8x32xf32>,
    } else {
    }
    %c0 = arith.constant 0 : index
    %c0_1 = arith.constant 0 : index
    %c0_2 = arith.constant 0 : index
    %3 = vector.load %arg2[%c0, %c0_1, %c0_2] : memref<4x8x16xf32, #tpu.memory_space<vmem>>, vector<4x8x16xf32>
    %4 = vector.shape_cast %3 : vector<4x8x16xf32> to vector<32x16xf32>
    %c0_3 = arith.constant 0 : index
    %c0_4 = arith.constant 0 : index
    %5 = vector.load %arg3[%c0_3, %c0_4] : memref<16x128xbf16, #tpu.memory_space<vmem>>, vector<16x128xbf16>
    %c0_5 = arith.constant 0 : index
    %c0_6 = arith.constant 0 : index
    %6 = vector.load %arg4[%c0_5, %c0_6] : memref<32x128xbf16, #tpu.memory_space<vmem>>, vector<32x128xbf16>
    %c0_7 = arith.constant 0 : index
    %c0_8 = arith.constant 0 : index
    %7 = vector.load %arg5[%c0_7, %c0_8] : memref<1x128xf32, #tpu.memory_space<vmem>>, vector<1x128xf32>
    %8 = arith.truncf %4 : vector<32x16xf32> to vector<32x16xbf16>
    %cst = arith.constant dense<0.000000e+00> : vector<32x128xf32>
    %9 = tpu.matmul %8, %5, %cst {dimension_numbers = #tpu.dot_dimension_numbers<[1], [0], [0], [1], [0, 0, 1, 1], [], []>} : vector<32x16xbf16>, vector<16x128xbf16>, vector<32x128xf32> -> vector<32x128xf32>
    %10 = vector.broadcast %7 : vector<1x128xf32> to vector<32x128xf32>
    %11 = arith.addf %9, %10 : vector<32x128xf32>
    %12 = vector.shape_cast %11 : vector<32x128xf32> to vector<4x8x128xf32>
    %c0_9 = arith.constant 0 : index
    %c0_10 = arith.constant 0 : index
    %c0_11 = arith.constant 0 : index
    %13 = vector.load %arg12[%c0_9, %c0_10, %c0_11] : memref<4x8x128xf32, #tpu.memory_space<vmem>>, vector<4x8x128xf32>
    tpu.vector_store %arg12[%c0_9, %c0_10, %c0_11], %12 {strides = array<i32>} : memref<4x8x128xf32, #tpu.memory_space<vmem>>, vector<4x8x128xf32>,
    %c0_12 = arith.constant 0 : index
    %c0_13 = arith.constant 0 : index
    %c0_14 = arith.constant 0 : index
    %14 = vector.load %arg14[%c0_12, %c0_13, %c0_14] : memref<2x8x32xf32, #tpu.memory_space<vmem>>, vector<1x8x32xf32>
    %15 = vector.shape_cast %14 : vector<1x8x32xf32> to vector<8x32xf32>
    %c0_15 = arith.constant 0 : index
    %c0_16 = arith.constant 0 : index
    %c0_17 = arith.constant 0 : index
    %16 = vector.load %arg15[%c0_15, %c0_16, %c0_17] : memref<2x8x32xf32, #tpu.memory_space<vmem>>, vector<1x8x32xf32>
    %17 = vector.shape_cast %16 : vector<1x8x32xf32> to vector<8x32xf32>
    %c0_i32_18 = arith.constant 0 : i32
    %18 = arith.index_cast %c0_i32_18 : i32 to index
    %c0_19 = arith.constant 0 : index
    %c0_20 = arith.constant 0 : index
    %19 = vector.load %arg12[%18, %c0_19, %c0_20] : memref<4x8x128xf32, #tpu.memory_space<vmem>>, vector<1x8x128xf32>
    %20 = vector.shape_cast %19 : vector<1x8x128xf32> to vector<8x128xf32>
    %21 = arith.truncf %15 : vector<8x32xf32> to vector<8x32xbf16>
    %cst_21 = arith.constant dense<0.000000e+00> : vector<8x128xf32>
    %22 = tpu.matmul %21, %6, %cst_21 {dimension_numbers = #tpu.dot_dimension_numbers<[1], [0], [0], [1], [0, 0, 1, 1], [], []>} : vector<8x32xbf16>, vector<32x128xbf16>, vector<8x128xf32> -> vector<8x128xf32>
    %23 = arith.addf %20, %22 : vector<8x128xf32>
    %24 = math.tanh %23 : vector<8x128xf32>
    %25 = vector.extract_strided_slice %24 {offsets = [0, 0], sizes = [8, 32], strides = [1, 1]} : vector<8x128xf32> to vector<8x32xf32>
    %cst_22 = arith.constant 1.000000e+00 : f32
    %26 = vector.broadcast %cst_22 : f32 to vector<8x32xf32>
    %27 = arith.addf %25, %26 : vector<8x32xf32>
    %cst_23 = arith.constant 5.000000e-01 : f32
    %28 = vector.broadcast %cst_23 : f32 to vector<8x32xf32>
    %29 = arith.mulf %28, %27 : vector<8x32xf32>
    %30 = vector.extract_strided_slice %24 {offsets = [0, 32], sizes = [8, 32], strides = [1, 1]} : vector<8x128xf32> to vector<8x32xf32>
    %cst_24 = arith.constant 1.000000e+00 : f32
    %31 = vector.broadcast %cst_24 : f32 to vector<8x32xf32>
    %32 = arith.addf %30, %31 : vector<8x32xf32>
    %cst_25 = arith.constant 5.000000e-01 : f32
    %33 = vector.broadcast %cst_25 : f32 to vector<8x32xf32>
    %34 = arith.mulf %33, %32 : vector<8x32xf32>
    %35 = vector.extract_strided_slice %24 {offsets = [0, 64], sizes = [8, 32], strides = [1, 1]} : vector<8x128xf32> to vector<8x32xf32>
    %36 = vector.extract_strided_slice %24 {offsets = [0, 96], sizes = [8, 32], strides = [1, 1]} : vector<8x128xf32> to vector<8x32xf32>
    %cst_26 = arith.constant 1.000000e+00 : f32
    %37 = vector.broadcast %cst_26 : f32 to vector<8x32xf32>
    %38 = arith.addf %36, %37 : vector<8x32xf32>
    %cst_27 = arith.constant 5.000000e-01 : f32
    %39 = vector.broadcast %cst_27 : f32 to vector<8x32xf32>
    %40 = arith.mulf %39, %38 : vector<8x32xf32>
    %41 = arith.mulf %34, %17 : vector<8x32xf32>
    %42 = arith.mulf %29, %35 : vector<8x32xf32>
    %43 = arith.addf %41, %42 : vector<8x32xf32>
    %44 = math.tanh %43 : vector<8x32xf32>
    %45 = arith.mulf %40, %44 : vector<8x32xf32>
    %46 = arith.index_cast %c0_i32_18 : i32 to index
    %c0_28 = arith.constant 0 : index
    %c0_29 = arith.constant 0 : index
    %47 = vector.load %arg13[%46, %c0_28, %c0_29] : memref<4x8x32xf32, #tpu.memory_space<vmem>>, vector<1x8x32xf32>
    %48 = vector.shape_cast %47 : vector<1x8x32xf32> to vector<8x32xf32>
    %49 = vector.shape_cast %45 : vector<8x32xf32> to vector<1x8x32xf32>
    tpu.vector_store %arg13[%46, %c0_28, %c0_29], %49 {strides = array<i32>} : memref<4x8x32xf32, #tpu.memory_space<vmem>>, vector<1x8x32xf32>,
    %c1_i32 = arith.constant 1 : i32
    %50 = arith.index_cast %c1_i32 : i32 to index
    %c0_30 = arith.constant 0 : index
    %c0_31 = arith.constant 0 : index
    %51 = vector.load %arg12[%50, %c0_30, %c0_31] : memref<4x8x128xf32, #tpu.memory_space<vmem>>, vector<1x8x128xf32>
    %52 = vector.shape_cast %51 : vector<1x8x128xf32> to vector<8x128xf32>
    %53 = arith.truncf %45 : vector<8x32xf32> to vector<8x32xbf16>
    %cst_32 = arith.constant dense<0.000000e+00> : vector<8x128xf32>
    %54 = tpu.matmul %53, %6, %cst_32 {dimension_numbers = #tpu.dot_dimension_numbers<[1], [0], [0], [1], [0, 0, 1, 1], [], []>} : vector<8x32xbf16>, vector<32x128xbf16>, vector<8x128xf32> -> vector<8x128xf32>
    %55 = arith.addf %52, %54 : vector<8x128xf32>
    %56 = math.tanh %55 : vector<8x128xf32>
    %57 = vector.extract_strided_slice %56 {offsets = [0, 0], sizes = [8, 32], strides = [1, 1]} : vector<8x128xf32> to vector<8x32xf32>
    %cst_33 = arith.constant 1.000000e+00 : f32
    %58 = vector.broadcast %cst_33 : f32 to vector<8x32xf32>
    %59 = arith.addf %57, %58 : vector<8x32xf32>
    %cst_34 = arith.constant 5.000000e-01 : f32
    %60 = vector.broadcast %cst_34 : f32 to vector<8x32xf32>
    %61 = arith.mulf %60, %59 : vector<8x32xf32>
    %62 = vector.extract_strided_slice %56 {offsets = [0, 32], sizes = [8, 32], strides = [1, 1]} : vector<8x128xf32> to vector<8x32xf32>
    %cst_35 = arith.constant 1.000000e+00 : f32
    %63 = vector.broadcast %cst_35 : f32 to vector<8x32xf32>
    %64 = arith.addf %62, %63 : vector<8x32xf32>
    %cst_36 = arith.constant 5.000000e-01 : f32
    %65 = vector.broadcast %cst_36 : f32 to vector<8x32xf32>
    %66 = arith.mulf %65, %64 : vector<8x32xf32>
    %67 = vector.extract_strided_slice %56 {offsets = [0, 64], sizes = [8, 32], strides = [1, 1]} : vector<8x128xf32> to vector<8x32xf32>
    %68 = vector.extract_strided_slice %56 {offsets = [0, 96], sizes = [8, 32], strides = [1, 1]} : vector<8x128xf32> to vector<8x32xf32>
    %cst_37 = arith.constant 1.000000e+00 : f32
    %69 = vector.broadcast %cst_37 : f32 to vector<8x32xf32>
    %70 = arith.addf %68, %69 : vector<8x32xf32>
    %cst_38 = arith.constant 5.000000e-01 : f32
    %71 = vector.broadcast %cst_38 : f32 to vector<8x32xf32>
    %72 = arith.mulf %71, %70 : vector<8x32xf32>
    %73 = arith.mulf %66, %43 : vector<8x32xf32>
    %74 = arith.mulf %61, %67 : vector<8x32xf32>
    %75 = arith.addf %73, %74 : vector<8x32xf32>
    %76 = math.tanh %75 : vector<8x32xf32>
    %77 = arith.mulf %72, %76 : vector<8x32xf32>
    %78 = arith.index_cast %c1_i32 : i32 to index
    %c0_39 = arith.constant 0 : index
    %c0_40 = arith.constant 0 : index
    %79 = vector.load %arg13[%78, %c0_39, %c0_40] : memref<4x8x32xf32, #tpu.memory_space<vmem>>, vector<1x8x32xf32>
    %80 = vector.shape_cast %79 : vector<1x8x32xf32> to vector<8x32xf32>
    %81 = vector.shape_cast %77 : vector<8x32xf32> to vector<1x8x32xf32>
    tpu.vector_store %arg13[%78, %c0_39, %c0_40], %81 {strides = array<i32>} : memref<4x8x32xf32, #tpu.memory_space<vmem>>, vector<1x8x32xf32>,
    %c2_i32 = arith.constant 2 : i32
    %82 = arith.index_cast %c2_i32 : i32 to index
    %c0_41 = arith.constant 0 : index
    %c0_42 = arith.constant 0 : index
    %83 = vector.load %arg12[%82, %c0_41, %c0_42] : memref<4x8x128xf32, #tpu.memory_space<vmem>>, vector<1x8x128xf32>
    %84 = vector.shape_cast %83 : vector<1x8x128xf32> to vector<8x128xf32>
    %85 = arith.truncf %77 : vector<8x32xf32> to vector<8x32xbf16>
    %cst_43 = arith.constant dense<0.000000e+00> : vector<8x128xf32>
    %86 = tpu.matmul %85, %6, %cst_43 {dimension_numbers = #tpu.dot_dimension_numbers<[1], [0], [0], [1], [0, 0, 1, 1], [], []>} : vector<8x32xbf16>, vector<32x128xbf16>, vector<8x128xf32> -> vector<8x128xf32>
    %87 = arith.addf %84, %86 : vector<8x128xf32>
    %88 = math.tanh %87 : vector<8x128xf32>
    %89 = vector.extract_strided_slice %88 {offsets = [0, 0], sizes = [8, 32], strides = [1, 1]} : vector<8x128xf32> to vector<8x32xf32>
    %cst_44 = arith.constant 1.000000e+00 : f32
    %90 = vector.broadcast %cst_44 : f32 to vector<8x32xf32>
    %91 = arith.addf %89, %90 : vector<8x32xf32>
    %cst_45 = arith.constant 5.000000e-01 : f32
    %92 = vector.broadcast %cst_45 : f32 to vector<8x32xf32>
    %93 = arith.mulf %92, %91 : vector<8x32xf32>
    %94 = vector.extract_strided_slice %88 {offsets = [0, 32], sizes = [8, 32], strides = [1, 1]} : vector<8x128xf32> to vector<8x32xf32>
    %cst_46 = arith.constant 1.000000e+00 : f32
    %95 = vector.broadcast %cst_46 : f32 to vector<8x32xf32>
    %96 = arith.addf %94, %95 : vector<8x32xf32>
    %cst_47 = arith.constant 5.000000e-01 : f32
    %97 = vector.broadcast %cst_47 : f32 to vector<8x32xf32>
    %98 = arith.mulf %97, %96 : vector<8x32xf32>
    %99 = vector.extract_strided_slice %88 {offsets = [0, 64], sizes = [8, 32], strides = [1, 1]} : vector<8x128xf32> to vector<8x32xf32>
    %100 = vector.extract_strided_slice %88 {offsets = [0, 96], sizes = [8, 32], strides = [1, 1]} : vector<8x128xf32> to vector<8x32xf32>
    %cst_48 = arith.constant 1.000000e+00 : f32
    %101 = vector.broadcast %cst_48 : f32 to vector<8x32xf32>
    %102 = arith.addf %100, %101 : vector<8x32xf32>
    %cst_49 = arith.constant 5.000000e-01 : f32
    %103 = vector.broadcast %cst_49 : f32 to vector<8x32xf32>
    %104 = arith.mulf %103, %102 : vector<8x32xf32>
    %105 = arith.mulf %98, %75 : vector<8x32xf32>
    %106 = arith.mulf %93, %99 : vector<8x32xf32>
    %107 = arith.addf %105, %106 : vector<8x32xf32>
    %108 = math.tanh %107 : vector<8x32xf32>
    %109 = arith.mulf %104, %108 : vector<8x32xf32>
    %110 = arith.index_cast %c2_i32 : i32 to index
    %c0_50 = arith.constant 0 : index
    %c0_51 = arith.constant 0 : index
    %111 = vector.load %arg13[%110, %c0_50, %c0_51] : memref<4x8x32xf32, #tpu.memory_space<vmem>>, vector<1x8x32xf32>
    %112 = vector.shape_cast %111 : vector<1x8x32xf32> to vector<8x32xf32>
    %113 = vector.shape_cast %109 : vector<8x32xf32> to vector<1x8x32xf32>
    tpu.vector_store %arg13[%110, %c0_50, %c0_51], %113 {strides = array<i32>} : memref<4x8x32xf32, #tpu.memory_space<vmem>>, vector<1x8x32xf32>,
    %c3_i32 = arith.constant 3 : i32
    %114 = arith.index_cast %c3_i32 : i32 to index
    %c0_52 = arith.constant 0 : index
    %c0_53 = arith.constant 0 : index
    %115 = vector.load %arg12[%114, %c0_52, %c0_53] : memref<4x8x128xf32, #tpu.memory_space<vmem>>, vector<1x8x128xf32>
    %116 = vector.shape_cast %115 : vector<1x8x128xf32> to vector<8x128xf32>
    %117 = arith.truncf %109 : vector<8x32xf32> to vector<8x32xbf16>
    %cst_54 = arith.constant dense<0.000000e+00> : vector<8x128xf32>
    %118 = tpu.matmul %117, %6, %cst_54 {dimension_numbers = #tpu.dot_dimension_numbers<[1], [0], [0], [1], [0, 0, 1, 1], [], []>} : vector<8x32xbf16>, vector<32x128xbf16>, vector<8x128xf32> -> vector<8x128xf32>
    %119 = arith.addf %116, %118 : vector<8x128xf32>
    %120 = math.tanh %119 : vector<8x128xf32>
    %121 = vector.extract_strided_slice %120 {offsets = [0, 0], sizes = [8, 32], strides = [1, 1]} : vector<8x128xf32> to vector<8x32xf32>
    %cst_55 = arith.constant 1.000000e+00 : f32
    %122 = vector.broadcast %cst_55 : f32 to vector<8x32xf32>
    %123 = arith.addf %121, %122 : vector<8x32xf32>
    %cst_56 = arith.constant 5.000000e-01 : f32
    %124 = vector.broadcast %cst_56 : f32 to vector<8x32xf32>
    %125 = arith.mulf %124, %123 : vector<8x32xf32>
    %126 = vector.extract_strided_slice %120 {offsets = [0, 32], sizes = [8, 32], strides = [1, 1]} : vector<8x128xf32> to vector<8x32xf32>
    %cst_57 = arith.constant 1.000000e+00 : f32
    %127 = vector.broadcast %cst_57 : f32 to vector<8x32xf32>
    %128 = arith.addf %126, %127 : vector<8x32xf32>
    %cst_58 = arith.constant 5.000000e-01 : f32
    %129 = vector.broadcast %cst_58 : f32 to vector<8x32xf32>
    %130 = arith.mulf %129, %128 : vector<8x32xf32>
    %131 = vector.extract_strided_slice %120 {offsets = [0, 64], sizes = [8, 32], strides = [1, 1]} : vector<8x128xf32> to vector<8x32xf32>
    %132 = vector.extract_strided_slice %120 {offsets = [0, 96], sizes = [8, 32], strides = [1, 1]} : vector<8x128xf32> to vector<8x32xf32>
    %cst_59 = arith.constant 1.000000e+00 : f32
    %133 = vector.broadcast %cst_59 : f32 to vector<8x32xf32>
    %134 = arith.addf %132, %133 : vector<8x32xf32>
    %cst_60 = arith.constant 5.000000e-01 : f32
    %135 = vector.broadcast %cst_60 : f32 to vector<8x32xf32>
    %136 = arith.mulf %135, %134 : vector<8x32xf32>
    %137 = arith.mulf %130, %107 : vector<8x32xf32>
    %138 = arith.mulf %125, %131 : vector<8x32xf32>
    %139 = arith.addf %137, %138 : vector<8x32xf32>
    %140 = math.tanh %139 : vector<8x32xf32>
    %141 = arith.mulf %136, %140 : vector<8x32xf32>
    %142 = arith.index_cast %c3_i32 : i32 to index
    %c0_61 = arith.constant 0 : index
    %c0_62 = arith.constant 0 : index
    %143 = vector.load %arg13[%142, %c0_61, %c0_62] : memref<4x8x32xf32, #tpu.memory_space<vmem>>, vector<1x8x32xf32>
    %144 = vector.shape_cast %143 : vector<1x8x32xf32> to vector<8x32xf32>
    %145 = vector.shape_cast %141 : vector<8x32xf32> to vector<1x8x32xf32>
    tpu.vector_store %arg13[%142, %c0_61, %c0_62], %145 {strides = array<i32>} : memref<4x8x32xf32, #tpu.memory_space<vmem>>, vector<1x8x32xf32>,
    %c4_i32 = arith.constant 4 : i32
    %c0_63 = arith.constant 0 : index
    %c0_64 = arith.constant 0 : index
    %c0_65 = arith.constant 0 : index
    %146 = vector.load %arg14[%c0_63, %c0_64, %c0_65] : memref<2x8x32xf32, #tpu.memory_space<vmem>>, vector<1x8x32xf32>
    %147 = vector.shape_cast %146 : vector<1x8x32xf32> to vector<8x32xf32>
    %148 = vector.shape_cast %141 : vector<8x32xf32> to vector<1x8x32xf32>
    tpu.vector_store %arg14[%c0_63, %c0_64, %c0_65], %148 {strides = array<i32>} : memref<2x8x32xf32, #tpu.memory_space<vmem>>, vector<1x8x32xf32>,
    %c0_66 = arith.constant 0 : index
    %c0_67 = arith.constant 0 : index
    %c0_68 = arith.constant 0 : index
    %149 = vector.load %arg15[%c0_66, %c0_67, %c0_68] : memref<2x8x32xf32, #tpu.memory_space<vmem>>, vector<1x8x32xf32>
    %150 = vector.shape_cast %149 : vector<1x8x32xf32> to vector<8x32xf32>
    %151 = vector.shape_cast %139 : vector<8x32xf32> to vector<1x8x32xf32>
    tpu.vector_store %arg15[%c0_66, %c0_67, %c0_68], %151 {strides = array<i32>} : memref<2x8x32xf32, #tpu.memory_space<vmem>>, vector<1x8x32xf32>,
    %c0_69 = arith.constant 0 : index
    %c0_70 = arith.constant 0 : index
    %c0_71 = arith.constant 0 : index
    %152 = vector.load %arg13[%c0_69, %c0_70, %c0_71] : memref<4x8x32xf32, #tpu.memory_space<vmem>>, vector<4x8x32xf32>
    %153 = vector.shape_cast %152 : vector<4x8x32xf32> to vector<32x32xf32>
    %c0_72 = arith.constant 0 : index
    %c0_73 = arith.constant 0 : index
    %154 = vector.load %arg6[%c0_72, %c0_73] : memref<32x128xbf16, #tpu.memory_space<vmem>>, vector<32x128xbf16>
    %c0_74 = arith.constant 0 : index
    %c0_75 = arith.constant 0 : index
    %155 = vector.load %arg7[%c0_74, %c0_75] : memref<32x128xbf16, #tpu.memory_space<vmem>>, vector<32x128xbf16>
    %c0_76 = arith.constant 0 : index
    %c0_77 = arith.constant 0 : index
    %156 = vector.load %arg8[%c0_76, %c0_77] : memref<1x128xf32, #tpu.memory_space<vmem>>, vector<1x128xf32>
    %157 = arith.truncf %153 : vector<32x32xf32> to vector<32x32xbf16>
    %cst_78 = arith.constant dense<0.000000e+00> : vector<32x128xf32>
    %158 = tpu.matmul %157, %154, %cst_78 {dimension_numbers = #tpu.dot_dimension_numbers<[1], [0], [0], [1], [0, 0, 1, 1], [], []>} : vector<32x32xbf16>, vector<32x128xbf16>, vector<32x128xf32> -> vector<32x128xf32>
    %159 = vector.broadcast %156 : vector<1x128xf32> to vector<32x128xf32>
    %160 = arith.addf %158, %159 : vector<32x128xf32>
    %161 = vector.shape_cast %160 : vector<32x128xf32> to vector<4x8x128xf32>
    %c0_79 = arith.constant 0 : index
    %c0_80 = arith.constant 0 : index
    %c0_81 = arith.constant 0 : index
    %162 = vector.load %arg12[%c0_79, %c0_80, %c0_81] : memref<4x8x128xf32, #tpu.memory_space<vmem>>, vector<4x8x128xf32>
    tpu.vector_store %arg12[%c0_79, %c0_80, %c0_81], %161 {strides = array<i32>} : memref<4x8x128xf32, #tpu.memory_space<vmem>>, vector<4x8x128xf32>,
    %c1 = arith.constant 1 : index
    %c0_82 = arith.constant 0 : index
    %c0_83 = arith.constant 0 : index
    %163 = vector.load %arg14[%c1, %c0_82, %c0_83] : memref<2x8x32xf32, #tpu.memory_space<vmem>>, vector<1x8x32xf32>
    %164 = vector.shape_cast %163 : vector<1x8x32xf32> to vector<8x32xf32>
    %c1_84 = arith.constant 1 : index
    %c0_85 = arith.constant 0 : index
    %c0_86 = arith.constant 0 : index
    %165 = vector.load %arg15[%c1_84, %c0_85, %c0_86] : memref<2x8x32xf32, #tpu.memory_space<vmem>>, vector<1x8x32xf32>
    %166 = vector.shape_cast %165 : vector<1x8x32xf32> to vector<8x32xf32>
    %c0_i32_87 = arith.constant 0 : i32
    %167 = arith.index_cast %c0_i32_87 : i32 to index
    %c0_88 = arith.constant 0 : index
    %c0_89 = arith.constant 0 : index
    %168 = vector.load %arg12[%167, %c0_88, %c0_89] : memref<4x8x128xf32, #tpu.memory_space<vmem>>, vector<1x8x128xf32>
    %169 = vector.shape_cast %168 : vector<1x8x128xf32> to vector<8x128xf32>
    %170 = arith.truncf %164 : vector<8x32xf32> to vector<8x32xbf16>
    %cst_90 = arith.constant dense<0.000000e+00> : vector<8x128xf32>
    %171 = tpu.matmul %170, %155, %cst_90 {dimension_numbers = #tpu.dot_dimension_numbers<[1], [0], [0], [1], [0, 0, 1, 1], [], []>} : vector<8x32xbf16>, vector<32x128xbf16>, vector<8x128xf32> -> vector<8x128xf32>
    %172 = arith.addf %169, %171 : vector<8x128xf32>
    %173 = math.tanh %172 : vector<8x128xf32>
    %174 = vector.extract_strided_slice %173 {offsets = [0, 0], sizes = [8, 32], strides = [1, 1]} : vector<8x128xf32> to vector<8x32xf32>
    %cst_91 = arith.constant 1.000000e+00 : f32
    %175 = vector.broadcast %cst_91 : f32 to vector<8x32xf32>
    %176 = arith.addf %174, %175 : vector<8x32xf32>
    %cst_92 = arith.constant 5.000000e-01 : f32
    %177 = vector.broadcast %cst_92 : f32 to vector<8x32xf32>
    %178 = arith.mulf %177, %176 : vector<8x32xf32>
    %179 = vector.extract_strided_slice %173 {offsets = [0, 32], sizes = [8, 32], strides = [1, 1]} : vector<8x128xf32> to vector<8x32xf32>
    %cst_93 = arith.constant 1.000000e+00 : f32
    %180 = vector.broadcast %cst_93 : f32 to vector<8x32xf32>
    %181 = arith.addf %179, %180 : vector<8x32xf32>
    %cst_94 = arith.constant 5.000000e-01 : f32
    %182 = vector.broadcast %cst_94 : f32 to vector<8x32xf32>
    %183 = arith.mulf %182, %181 : vector<8x32xf32>
    %184 = vector.extract_strided_slice %173 {offsets = [0, 64], sizes = [8, 32], strides = [1, 1]} : vector<8x128xf32> to vector<8x32xf32>
    %185 = vector.extract_strided_slice %173 {offsets = [0, 96], sizes = [8, 32], strides = [1, 1]} : vector<8x128xf32> to vector<8x32xf32>
    %cst_95 = arith.constant 1.000000e+00 : f32
    %186 = vector.broadcast %cst_95 : f32 to vector<8x32xf32>
    %187 = arith.addf %185, %186 : vector<8x32xf32>
    %cst_96 = arith.constant 5.000000e-01 : f32
    %188 = vector.broadcast %cst_96 : f32 to vector<8x32xf32>
    %189 = arith.mulf %188, %187 : vector<8x32xf32>
    %190 = arith.mulf %183, %166 : vector<8x32xf32>
    %191 = arith.mulf %178, %184 : vector<8x32xf32>
    %192 = arith.addf %190, %191 : vector<8x32xf32>
    %193 = math.tanh %192 : vector<8x32xf32>
    %194 = arith.mulf %189, %193 : vector<8x32xf32>
    %195 = arith.index_cast %c0_i32_87 : i32 to index
    %c0_97 = arith.constant 0 : index
    %c0_98 = arith.constant 0 : index
    %196 = vector.load %arg9[%195, %c0_97, %c0_98] : memref<4x8x32xf32, #tpu.memory_space<vmem>>, vector<1x8x32xf32>
    %197 = vector.shape_cast %196 : vector<1x8x32xf32> to vector<8x32xf32>
    %198 = vector.shape_cast %194 : vector<8x32xf32> to vector<1x8x32xf32>
    tpu.vector_store %arg9[%195, %c0_97, %c0_98], %198 {strides = array<i32>} : memref<4x8x32xf32, #tpu.memory_space<vmem>>, vector<1x8x32xf32>,
    %c1_i32_99 = arith.constant 1 : i32
    %199 = arith.index_cast %c1_i32_99 : i32 to index
    %c0_100 = arith.constant 0 : index
    %c0_101 = arith.constant 0 : index
    %200 = vector.load %arg12[%199, %c0_100, %c0_101] : memref<4x8x128xf32, #tpu.memory_space<vmem>>, vector<1x8x128xf32>
    %201 = vector.shape_cast %200 : vector<1x8x128xf32> to vector<8x128xf32>
    %202 = arith.truncf %194 : vector<8x32xf32> to vector<8x32xbf16>
    %cst_102 = arith.constant dense<0.000000e+00> : vector<8x128xf32>
    %203 = tpu.matmul %202, %155, %cst_102 {dimension_numbers = #tpu.dot_dimension_numbers<[1], [0], [0], [1], [0, 0, 1, 1], [], []>} : vector<8x32xbf16>, vector<32x128xbf16>, vector<8x128xf32> -> vector<8x128xf32>
    %204 = arith.addf %201, %203 : vector<8x128xf32>
    %205 = math.tanh %204 : vector<8x128xf32>
    %206 = vector.extract_strided_slice %205 {offsets = [0, 0], sizes = [8, 32], strides = [1, 1]} : vector<8x128xf32> to vector<8x32xf32>
    %cst_103 = arith.constant 1.000000e+00 : f32
    %207 = vector.broadcast %cst_103 : f32 to vector<8x32xf32>
    %208 = arith.addf %206, %207 : vector<8x32xf32>
    %cst_104 = arith.constant 5.000000e-01 : f32
    %209 = vector.broadcast %cst_104 : f32 to vector<8x32xf32>
    %210 = arith.mulf %209, %208 : vector<8x32xf32>
    %211 = vector.extract_strided_slice %205 {offsets = [0, 32], sizes = [8, 32], strides = [1, 1]} : vector<8x128xf32> to vector<8x32xf32>
    %cst_105 = arith.constant 1.000000e+00 : f32
    %212 = vector.broadcast %cst_105 : f32 to vector<8x32xf32>
    %213 = arith.addf %211, %212 : vector<8x32xf32>
    %cst_106 = arith.constant 5.000000e-01 : f32
    %214 = vector.broadcast %cst_106 : f32 to vector<8x32xf32>
    %215 = arith.mulf %214, %213 : vector<8x32xf32>
    %216 = vector.extract_strided_slice %205 {offsets = [0, 64], sizes = [8, 32], strides = [1, 1]} : vector<8x128xf32> to vector<8x32xf32>
    %217 = vector.extract_strided_slice %205 {offsets = [0, 96], sizes = [8, 32], strides = [1, 1]} : vector<8x128xf32> to vector<8x32xf32>
    %cst_107 = arith.constant 1.000000e+00 : f32
    %218 = vector.broadcast %cst_107 : f32 to vector<8x32xf32>
    %219 = arith.addf %217, %218 : vector<8x32xf32>
    %cst_108 = arith.constant 5.000000e-01 : f32
    %220 = vector.broadcast %cst_108 : f32 to vector<8x32xf32>
    %221 = arith.mulf %220, %219 : vector<8x32xf32>
    %222 = arith.mulf %215, %192 : vector<8x32xf32>
    %223 = arith.mulf %210, %216 : vector<8x32xf32>
    %224 = arith.addf %222, %223 : vector<8x32xf32>
    %225 = math.tanh %224 : vector<8x32xf32>
    %226 = arith.mulf %221, %225 : vector<8x32xf32>
    %227 = arith.index_cast %c1_i32_99 : i32 to index
    %c0_109 = arith.constant 0 : index
    %c0_110 = arith.constant 0 : index
    %228 = vector.load %arg9[%227, %c0_109, %c0_110] : memref<4x8x32xf32, #tpu.memory_space<vmem>>, vector<1x8x32xf32>
    %229 = vector.shape_cast %228 : vector<1x8x32xf32> to vector<8x32xf32>
    %230 = vector.shape_cast %226 : vector<8x32xf32> to vector<1x8x32xf32>
    tpu.vector_store %arg9[%227, %c0_109, %c0_110], %230 {strides = array<i32>} : memref<4x8x32xf32, #tpu.memory_space<vmem>>, vector<1x8x32xf32>,
    %c2_i32_111 = arith.constant 2 : i32
    %231 = arith.index_cast %c2_i32_111 : i32 to index
    %c0_112 = arith.constant 0 : index
    %c0_113 = arith.constant 0 : index
    %232 = vector.load %arg12[%231, %c0_112, %c0_113] : memref<4x8x128xf32, #tpu.memory_space<vmem>>, vector<1x8x128xf32>
    %233 = vector.shape_cast %232 : vector<1x8x128xf32> to vector<8x128xf32>
    %234 = arith.truncf %226 : vector<8x32xf32> to vector<8x32xbf16>
    %cst_114 = arith.constant dense<0.000000e+00> : vector<8x128xf32>
    %235 = tpu.matmul %234, %155, %cst_114 {dimension_numbers = #tpu.dot_dimension_numbers<[1], [0], [0], [1], [0, 0, 1, 1], [], []>} : vector<8x32xbf16>, vector<32x128xbf16>, vector<8x128xf32> -> vector<8x128xf32>
    %236 = arith.addf %233, %235 : vector<8x128xf32>
    %237 = math.tanh %236 : vector<8x128xf32>
    %238 = vector.extract_strided_slice %237 {offsets = [0, 0], sizes = [8, 32], strides = [1, 1]} : vector<8x128xf32> to vector<8x32xf32>
    %cst_115 = arith.constant 1.000000e+00 : f32
    %239 = vector.broadcast %cst_115 : f32 to vector<8x32xf32>
    %240 = arith.addf %238, %239 : vector<8x32xf32>
    %cst_116 = arith.constant 5.000000e-01 : f32
    %241 = vector.broadcast %cst_116 : f32 to vector<8x32xf32>
    %242 = arith.mulf %241, %240 : vector<8x32xf32>
    %243 = vector.extract_strided_slice %237 {offsets = [0, 32], sizes = [8, 32], strides = [1, 1]} : vector<8x128xf32> to vector<8x32xf32>
    %cst_117 = arith.constant 1.000000e+00 : f32
    %244 = vector.broadcast %cst_117 : f32 to vector<8x32xf32>
    %245 = arith.addf %243, %244 : vector<8x32xf32>
    %cst_118 = arith.constant 5.000000e-01 : f32
    %246 = vector.broadcast %cst_118 : f32 to vector<8x32xf32>
    %247 = arith.mulf %246, %245 : vector<8x32xf32>
    %248 = vector.extract_strided_slice %237 {offsets = [0, 64], sizes = [8, 32], strides = [1, 1]} : vector<8x128xf32> to vector<8x32xf32>
    %249 = vector.extract_strided_slice %237 {offsets = [0, 96], sizes = [8, 32], strides = [1, 1]} : vector<8x128xf32> to vector<8x32xf32>
    %cst_119 = arith.constant 1.000000e+00 : f32
    %250 = vector.broadcast %cst_119 : f32 to vector<8x32xf32>
    %251 = arith.addf %249, %250 : vector<8x32xf32>
    %cst_120 = arith.constant 5.000000e-01 : f32
    %252 = vector.broadcast %cst_120 : f32 to vector<8x32xf32>
    %253 = arith.mulf %252, %251 : vector<8x32xf32>
    %254 = arith.mulf %247, %224 : vector<8x32xf32>
    %255 = arith.mulf %242, %248 : vector<8x32xf32>
    %256 = arith.addf %254, %255 : vector<8x32xf32>
    %257 = math.tanh %256 : vector<8x32xf32>
    %258 = arith.mulf %253, %257 : vector<8x32xf32>
    %259 = arith.index_cast %c2_i32_111 : i32 to index
    %c0_121 = arith.constant 0 : index
    %c0_122 = arith.constant 0 : index
    %260 = vector.load %arg9[%259, %c0_121, %c0_122] : memref<4x8x32xf32, #tpu.memory_space<vmem>>, vector<1x8x32xf32>
    %261 = vector.shape_cast %260 : vector<1x8x32xf32> to vector<8x32xf32>
    %262 = vector.shape_cast %258 : vector<8x32xf32> to vector<1x8x32xf32>
    tpu.vector_store %arg9[%259, %c0_121, %c0_122], %262 {strides = array<i32>} : memref<4x8x32xf32, #tpu.memory_space<vmem>>, vector<1x8x32xf32>,
    %c3_i32_123 = arith.constant 3 : i32
    %263 = arith.index_cast %c3_i32_123 : i32 to index
    %c0_124 = arith.constant 0 : index
    %c0_125 = arith.constant 0 : index
    %264 = vector.load %arg12[%263, %c0_124, %c0_125] : memref<4x8x128xf32, #tpu.memory_space<vmem>>, vector<1x8x128xf32>
    %265 = vector.shape_cast %264 : vector<1x8x128xf32> to vector<8x128xf32>
    %266 = arith.truncf %258 : vector<8x32xf32> to vector<8x32xbf16>
    %cst_126 = arith.constant dense<0.000000e+00> : vector<8x128xf32>
    %267 = tpu.matmul %266, %155, %cst_126 {dimension_numbers = #tpu.dot_dimension_numbers<[1], [0], [0], [1], [0, 0, 1, 1], [], []>} : vector<8x32xbf16>, vector<32x128xbf16>, vector<8x128xf32> -> vector<8x128xf32>
    %268 = arith.addf %265, %267 : vector<8x128xf32>
    %269 = math.tanh %268 : vector<8x128xf32>
    %270 = vector.extract_strided_slice %269 {offsets = [0, 0], sizes = [8, 32], strides = [1, 1]} : vector<8x128xf32> to vector<8x32xf32>
    %cst_127 = arith.constant 1.000000e+00 : f32
    %271 = vector.broadcast %cst_127 : f32 to vector<8x32xf32>
    %272 = arith.addf %270, %271 : vector<8x32xf32>
    %cst_128 = arith.constant 5.000000e-01 : f32
    %273 = vector.broadcast %cst_128 : f32 to vector<8x32xf32>
    %274 = arith.mulf %273, %272 : vector<8x32xf32>
    %275 = vector.extract_strided_slice %269 {offsets = [0, 32], sizes = [8, 32], strides = [1, 1]} : vector<8x128xf32> to vector<8x32xf32>
    %cst_129 = arith.constant 1.000000e+00 : f32
    %276 = vector.broadcast %cst_129 : f32 to vector<8x32xf32>
    %277 = arith.addf %275, %276 : vector<8x32xf32>
    %cst_130 = arith.constant 5.000000e-01 : f32
    %278 = vector.broadcast %cst_130 : f32 to vector<8x32xf32>
    %279 = arith.mulf %278, %277 : vector<8x32xf32>
    %280 = vector.extract_strided_slice %269 {offsets = [0, 64], sizes = [8, 32], strides = [1, 1]} : vector<8x128xf32> to vector<8x32xf32>
    %281 = vector.extract_strided_slice %269 {offsets = [0, 96], sizes = [8, 32], strides = [1, 1]} : vector<8x128xf32> to vector<8x32xf32>
    %cst_131 = arith.constant 1.000000e+00 : f32
    %282 = vector.broadcast %cst_131 : f32 to vector<8x32xf32>
    %283 = arith.addf %281, %282 : vector<8x32xf32>
    %cst_132 = arith.constant 5.000000e-01 : f32
    %284 = vector.broadcast %cst_132 : f32 to vector<8x32xf32>
    %285 = arith.mulf %284, %283 : vector<8x32xf32>
    %286 = arith.mulf %279, %256 : vector<8x32xf32>
    %287 = arith.mulf %274, %280 : vector<8x32xf32>
    %288 = arith.addf %286, %287 : vector<8x32xf32>
    %289 = math.tanh %288 : vector<8x32xf32>
    %290 = arith.mulf %285, %289 : vector<8x32xf32>
    %291 = arith.index_cast %c3_i32_123 : i32 to index
    %c0_133 = arith.constant 0 : index
    %c0_134 = arith.constant 0 : index
    %292 = vector.load %arg9[%291, %c0_133, %c0_134] : memref<4x8x32xf32, #tpu.memory_space<vmem>>, vector<1x8x32xf32>
    %293 = vector.shape_cast %292 : vector<1x8x32xf32> to vector<8x32xf32>
    %294 = vector.shape_cast %290 : vector<8x32xf32> to vector<1x8x32xf32>
    tpu.vector_store %arg9[%291, %c0_133, %c0_134], %294 {strides = array<i32>} : memref<4x8x32xf32, #tpu.memory_space<vmem>>, vector<1x8x32xf32>,
    %c4_i32_135 = arith.constant 4 : i32
    %c1_136 = arith.constant 1 : index
    %c0_137 = arith.constant 0 : index
    %c0_138 = arith.constant 0 : index
    %295 = vector.load %arg14[%c1_136, %c0_137, %c0_138] : memref<2x8x32xf32, #tpu.memory_space<vmem>>, vector<1x8x32xf32>
    %296 = vector.shape_cast %295 : vector<1x8x32xf32> to vector<8x32xf32>
    %297 = vector.shape_cast %290 : vector<8x32xf32> to vector<1x8x32xf32>
    tpu.vector_store %arg14[%c1_136, %c0_137, %c0_138], %297 {strides = array<i32>} : memref<2x8x32xf32, #tpu.memory_space<vmem>>, vector<1x8x32xf32>,
    %c1_139 = arith.constant 1 : index
    %c0_140 = arith.constant 0 : index
    %c0_141 = arith.constant 0 : index
    %298 = vector.load %arg15[%c1_139, %c0_140, %c0_141] : memref<2x8x32xf32, #tpu.memory_space<vmem>>, vector<1x8x32xf32>
    %299 = vector.shape_cast %298 : vector<1x8x32xf32> to vector<8x32xf32>
    %300 = vector.shape_cast %288 : vector<8x32xf32> to vector<1x8x32xf32>
    tpu.vector_store %arg15[%c1_139, %c0_140, %c0_141], %300 {strides = array<i32>} : memref<2x8x32xf32, #tpu.memory_space<vmem>>, vector<1x8x32xf32>,
    %c1_i32_142 = arith.constant 1 : i32
    %301 = arith.cmpi eq, %arg1, %c1_i32_142 : i32
    %302 = arith.extui %301 : i1 to i32
    %c0_i32_143 = arith.constant 0 : i32
    %303 = arith.cmpi ne, %302, %c0_i32_143 : i32
    scf.if %303 {
      %c0_144 = arith.constant 0 : index
      %c0_145 = arith.constant 0 : index
      %c0_146 = arith.constant 0 : index
      %304 = vector.load %arg14[%c0_144, %c0_145, %c0_146] : memref<2x8x32xf32, #tpu.memory_space<vmem>>, vector<2x8x32xf32>
      %c0_147 = arith.constant 0 : index
      %c0_148 = arith.constant 0 : index
      %c0_149 = arith.constant 0 : index
      %305 = vector.load %arg10[%c0_147, %c0_148, %c0_149] : memref<2x8x32xf32, #tpu.memory_space<vmem>>, vector<2x8x32xf32>
      tpu.vector_store %arg10[%c0_147, %c0_148, %c0_149], %304 {strides = array<i32>} : memref<2x8x32xf32, #tpu.memory_space<vmem>>, vector<2x8x32xf32>,
      %c0_150 = arith.constant 0 : index
      %c0_151 = arith.constant 0 : index
      %c0_152 = arith.constant 0 : index
      %306 = vector.load %arg15[%c0_150, %c0_151, %c0_152] : memref<2x8x32xf32, #tpu.memory_space<vmem>>, vector<2x8x32xf32>
      %c0_153 = arith.constant 0 : index
      %c0_154 = arith.constant 0 : index
      %c0_155 = arith.constant 0 : index
      %307 = vector.load %arg11[%c0_153, %c0_154, %c0_155] : memref<2x8x32xf32, #tpu.memory_space<vmem>>, vector<2x8x32xf32>
      tpu.vector_store %arg11[%c0_153, %c0_154, %c0_155], %306 {strides = array<i32>} : memref<2x8x32xf32, #tpu.memory_space<vmem>>, vector<2x8x32xf32>,
    } else {
    }
    return
  }
  func.func @transform_0(%arg0: i32, %arg1: i32) -> (i32, i32, i32) {
    %c0_i32 = arith.constant 0 : i32
    %c0_i32_0 = arith.constant 0 : i32
    return %arg1, %arg0, %c0_i32 : i32, i32, i32
  }
  func.func @transform_1(%arg0: i32, %arg1: i32) -> (i32, i32) {
    %c0_i32 = arith.constant 0 : i32
    %c0_i32_0 = arith.constant 0 : i32
    %c0_i32_1 = arith.constant 0 : i32
    return %c0_i32, %c0_i32_0 : i32, i32
  }
  func.func @transform_2(%arg0: i32, %arg1: i32) -> (i32, i32) {
    %c0_i32 = arith.constant 0 : i32
    %c0_i32_0 = arith.constant 0 : i32
    %c0_i32_1 = arith.constant 0 : i32
    return %c0_i32, %c0_i32_0 : i32, i32
  }
  func.func @transform_3(%arg0: i32, %arg1: i32) -> (i32, i32) {
    %c0_i32 = arith.constant 0 : i32
    %c0_i32_0 = arith.constant 0 : i32
    %c0_i32_1 = arith.constant 0 : i32
    return %c0_i32, %c0_i32_0 : i32, i32
  }
  func.func @transform_4(%arg0: i32, %arg1: i32) -> (i32, i32) {
    %c0_i32 = arith.constant 0 : i32
    %c0_i32_0 = arith.constant 0 : i32
    %c0_i32_1 = arith.constant 0 : i32
    return %c0_i32, %c0_i32_0 : i32, i32
  }
  func.func @transform_5(%arg0: i32, %arg1: i32) -> (i32, i32) {
    %c0_i32 = arith.constant 0 : i32
    %c0_i32_0 = arith.constant 0 : i32
    %c0_i32_1 = arith.constant 0 : i32
    return %c0_i32, %c0_i32_0 : i32, i32
  }
  func.func @transform_6(%arg0: i32, %arg1: i32) -> (i32, i32) {
    %c0_i32 = arith.constant 0 : i32
    %c0_i32_0 = arith.constant 0 : i32
    %c0_i32_1 = arith.constant 0 : i32
    return %c0_i32, %c0_i32_0 : i32, i32
  }
  func.func @transform_7(%arg0: i32, %arg1: i32) -> (i32, i32, i32) {
    %c0_i32 = arith.constant 0 : i32
    %c0_i32_0 = arith.constant 0 : i32
    return %arg1, %arg0, %c0_i32 : i32, i32, i32
  }
  func.func @transform_8(%arg0: i32, %arg1: i32) -> (i32, i32, i32) {
    %c0_i32 = arith.constant 0 : i32
    %c0_i32_0 = arith.constant 0 : i32
    %c0_i32_1 = arith.constant 0 : i32
    return %c0_i32, %arg0, %c0_i32_0 : i32, i32, i32
  }
  func.func @transform_9(%arg0: i32, %arg1: i32) -> (i32, i32, i32) {
    %c0_i32 = arith.constant 0 : i32
    %c0_i32_0 = arith.constant 0 : i32
    %c0_i32_1 = arith.constant 0 : i32
    return %c0_i32, %arg0, %c0_i32_0 : i32, i32, i32
  }
}

</mosaic_0001>

<llo_original>
// kernel: rnn_compartment_forward.1
$region0: #{rnn_compartment_forward.1}
  #allocation0 [shape = 'u32[]', space=smem, size = 0x4, offset = 0x4, fixed_abs, tag = 'smem constant byte address 0x4 - core index']
  #allocation1 [shape = 'u32[144,128]{1,0:T(1,128)}', space=vmem, size = 0x12000, scoped, tag = 'internal scratch']
  #allocation2 [shape = 'f32[4,8,128]{2,1,0:T(8,128)}', space=vmem, size = 0x4000, scoped, tag = 'scratch operand']
  #allocation3 [shape = 'f32[4,8,32]{2,1,0:T(8,128)}', space=vmem, size = 0x4000, scoped, tag = 'scratch operand']
  #allocation4 [shape = 'f32[2,8,32]{2,1,0:T(8,128)}', space=vmem, size = 0x2000, scoped, tag = 'scratch operand']
  #allocation5 [shape = 'f32[2,8,32]{2,1,0:T(8,128)}', space=vmem, size = 0x2000, scoped, tag = 'scratch operand']
  %s0 = inlined_call_operand.vmem [shape: f32[8,8,16], index: 0, kind: input, shape index: {}]
  %s1 = inlined_call_operand.vmem [shape: bf16[16,128], index: 1, kind: input, shape index: {}]
  %s2 = inlined_call_operand.vmem [shape: bf16[32,128], index: 2, kind: input, shape index: {}]
  %s3 = inlined_call_operand.vmem [shape: f32[1,128], index: 3, kind: input, shape index: {}]
  %s4 = inlined_call_operand.vmem [shape: bf16[32,128], index: 4, kind: input, shape index: {}]
  %s5 = inlined_call_operand.vmem [shape: bf16[32,128], index: 5, kind: input, shape index: {}]
  %s6 = inlined_call_operand.vmem [shape: f32[1,128], index: 6, kind: input, shape index: {}]
  %s7 = inlined_call_operand.vmem [shape: f32[8,8,32], index: 7, kind: output, shape index: {0}]
  %s8 = inlined_call_operand.vmem [shape: f32[2,8,32], index: 8, kind: output, shape index: {1}]
  %s9 = inlined_call_operand.vmem [shape: f32[2,8,32], index: 9, kind: output, shape index: {2}]
  %10 = xla_tuple %s7, %s8, %s9
  %s11 = sld [smem:[#allocation0]]
  $region85: #{rnn_compartment_forward.1} parent=0
    _
  %s13 = ssub.s32 1, %s11
  %s14 = scalar_select 0, %s13, %s11
  loop: start=0, step=1, limit=4
  $region2: #{rnn_compartment_forward.1} parent=0 // loop_pre_header
    _
  $region3: #{rnn_compartment_forward.1} parent=0 // loop_header
    %s16 = sphi 0, %s20
    %p17 = scmp.ge.s32.totalorder %s16, 4
    %s23 = sphi 0, %s35
    %s24 = sphi 0, %s31
    %s25 = sphi 0, %s23
    %s26 = sphi 0, %s24
    %s27 = sphi 0, %s25
    %s28 = sphi 0, %s26
    %s40 = sphi 0, %s42
    %s43 = sphi 0, %s40
    %s44 = sphi 0, %s43
    %s60 = sphi 0, %s44
    %s64 = sphi 0, %s64
    %s66 = sphi 0, %s64
    %s67 = sphi 0, %s66
    %s81 = sphi 0, %s67
    %s85 = sphi 0, %s85
    %s87 = sphi 0, %s85
    %s88 = sphi 0, %s87
    %s102 = sphi 0, %s88
    %s106 = sphi 0, %s106
    %s108 = sphi 0, %s106
    %s109 = sphi 0, %s108
    %s123 = sphi 0, %s109
    %s127 = sphi 0, %s127
    %s129 = sphi 0, %s127
    %s130 = sphi 0, %s129
    %s144 = sphi 0, %s130
    %s148 = sphi 0, %s148
    %s150 = sphi 0, %s148
    %s151 = sphi 0, %s150
    %s165 = sphi 0, %s151
    %s169 = sphi 0, %s169
    %s171 = sphi 0, %s169
    %s172 = sphi 0, %s171
    %s186 = sphi 0, %s172
    %s194 = sphi 0, %s196
    %s197 = sphi 0, %s194
    %s198 = sphi 0, %s197
    %s214 = sphi 0, %s198
    %s220 = sphi 0, %s222
    %s223 = sphi 0, %s220
    %s224 = sphi 0, %s223
    %s240 = sphi 0, %s224
    %s246 = sphi 0, %s248
    %s249 = sphi 0, %s246
    %s250 = sphi 0, %s249
    %s266 = sphi 0, %s250
  $region4: #{rnn_compartment_forward.1} parent=0 // loop_header_branch
    %19 = sbr.rel (%p17) target = $region8
  $region5: #{rnn_compartment_forward.1} parent=0 // loop_body
    %s21 = ssub.s32 %s16, 1
    %s22 = ssub.s32 %s16, 2
    %s29 = sadd.s32 1, %s24
    %p30 = scmp.ge.s32.totalorder %s29, 2
    %s31 = scalar_select %p30, 0, %s29
    %s32 = sadd.s32 1, %s23
    %s33 = scalar_select %p30, %s32, %s23
    %p34 = scmp.ge.s32.totalorder %s33, 1
    %s35 = scalar_select %p34, 0, %s33
    %s36 = ssub.s32 %s24, %s31
    %s37 = ssub.s32 %s23, %s35
    %s38 = sor.u32 %s36, %s37
    %p39 = scmp.eq.s32.totalorder %s38, 0
    %s41 = sadd.s32 %s40, 1
    %s42 = scalar_select %p39, %s40, %s41
    %p45 = pneg %p39
    %p46 = scmp.eq.s32.totalorder %s16, 1
    %p47 = por %p45, %p46
    %p48 = scmp.ne.s32.totalorder %s40, %s43
    %p49 = scmp.eq.s32.totalorder %s16, 0
    %p50 = por %p48, %p49
    %p51 = scmp.ne.s32.totalorder %s40, %s43
    %p52 = scmp.eq.s32.totalorder %s21, 1
    %p53 = por %p51, %p52
    %p54 = scmp.ne.s32.totalorder %s43, %s44
    %p55 = scmp.eq.s32.totalorder %s21, 0
    %p56 = por %p54, %p55
    %p57 = scmp.ne.s32.totalorder %s43, %s44
    %p58 = scmp.eq.s32.totalorder %s22, 1
    %p59 = por %p57, %p58
    %p61 = scmp.ne.s32.totalorder %s44, %s60
    %p62 = scmp.eq.s32.totalorder %s22, 0
    %p63 = por %p61, %p62
    %s65 = sadd.s32 %s64, 1
    %p68 = scmp.eq.s32.totalorder %s16, 1
    %p69 = scmp.ne.s32.totalorder %s64, %s66
    %p70 = scmp.eq.s32.totalorder %s16, 0
    %p71 = por %p69, %p70
    %p72 = scmp.ne.s32.totalorder %s64, %s66
    %p73 = scmp.eq.s32.totalorder %s21, 1
    %p74 = por %p72, %p73
    %p75 = scmp.ne.s32.totalorder %s66, %s67
    %p76 = scmp.eq.s32.totalorder %s21, 0
    %p77 = por %p75, %p76
    %p78 = scmp.ne.s32.totalorder %s66, %s67
    %p79 = scmp.eq.s32.totalorder %s22, 1
    %p80 = por %p78, %p79
    %p82 = scmp.ne.s32.totalorder %s67, %s81
    %p83 = scmp.eq.s32.totalorder %s22, 0
    %p84 = por %p82, %p83
    %s86 = sadd.s32 %s85, 1
    %p89 = scmp.eq.s32.totalorder %s16, 1
    %p90 = scmp.ne.s32.totalorder %s85, %s87
    %p91 = scmp.eq.s32.totalorder %s16, 0
    %p92 = por %p90, %p91
    %p93 = scmp.ne.s32.totalorder %s85, %s87
    %p94 = scmp.eq.s32.totalorder %s21, 1
    %p95 = por %p93, %p94
    %p96 = scmp.ne.s32.totalorder %s87, %s88
    %p97 = scmp.eq.s32.totalorder %s21, 0
    %p98 = por %p96, %p97
    %p99 = scmp.ne.s32.totalorder %s87, %s88
    %p100 = scmp.eq.s32.totalorder %s22, 1
    %p101 = por %p99, %p100
    %p103 = scmp.ne.s32.totalorder %s88, %s102
    %p104 = scmp.eq.s32.totalorder %s22, 0
    %p105 = por %p103, %p104
    %s107 = sadd.s32 %s106, 1
    %p110 = scmp.eq.s32.totalorder %s16, 1
    %p111 = scmp.ne.s32.totalorder %s106, %s108
    %p112 = scmp.eq.s32.totalorder %s16, 0
    %p113 = por %p111, %p112
    %p114 = scmp.ne.s32.totalorder %s106, %s108
    %p115 = scmp.eq.s32.totalorder %s21, 1
    %p116 = por %p114, %p115
    %p117 = scmp.ne.s32.totalorder %s108, %s109
    %p118 = scmp.eq.s32.totalorder %s21, 0
    %p119 = por %p117, %p118
    %p120 = scmp.ne.s32.totalorder %s108, %s109
    %p121 = scmp.eq.s32.totalorder %s22, 1
    %p122 = por %p120, %p121
    %p124 = scmp.ne.s32.totalorder %s109, %s123
    %p125 = scmp.eq.s32.totalorder %s22, 0
    %p126 = por %p124, %p125
    %s128 = sadd.s32 %s127, 1
    %p131 = scmp.eq.s32.totalorder %s16, 1
    %p132 = scmp.ne.s32.totalorder %s127, %s129
    %p133 = scmp.eq.s32.totalorder %s16, 0
    %p134 = por %p132, %p133
    %p135 = scmp.ne.s32.totalorder %s127, %s129
    %p136 = scmp.eq.s32.totalorder %s21, 1
    %p137 = por %p135, %p136
    %p138 = scmp.ne.s32.totalorder %s129, %s130
    %p139 = scmp.eq.s32.totalorder %s21, 0
    %p140 = por %p138, %p139
    %p141 = scmp.ne.s32.totalorder %s129, %s130
    %p142 = scmp.eq.s32.totalorder %s22, 1
    %p143 = por %p141, %p142
    %p145 = scmp.ne.s32.totalorder %s130, %s144
    %p146 = scmp.eq.s32.totalorder %s22, 0
    %p147 = por %p145, %p146
    %s149 = sadd.s32 %s148, 1
    %p152 = scmp.eq.s32.totalorder %s16, 1
    %p153 = scmp.ne.s32.totalorder %s148, %s150
    %p154 = scmp.eq.s32.totalorder %s16, 0
    %p155 = por %p153, %p154
    %p156 = scmp.ne.s32.totalorder %s148, %s150
    %p157 = scmp.eq.s32.totalorder %s21, 1
    %p158 = por %p156, %p157
    %p159 = scmp.ne.s32.totalorder %s150, %s151
    %p160 = scmp.eq.s32.totalorder %s21, 0
    %p161 = por %p159, %p160
    %p162 = scmp.ne.s32.totalorder %s150, %s151
    %p163 = scmp.eq.s32.totalorder %s22, 1
    %p164 = por %p162, %p163
    %p166 = scmp.ne.s32.totalorder %s151, %s165
    %p167 = scmp.eq.s32.totalorder %s22, 0
    %p168 = por %p166, %p167
    %s170 = sadd.s32 %s169, 1
    %p173 = scmp.eq.s32.totalorder %s16, 1
    %p174 = scmp.ne.s32.totalorder %s169, %s171
    %p175 = scmp.eq.s32.totalorder %s16, 0
    %p176 = por %p174, %p175
    %p177 = scmp.ne.s32.totalorder %s169, %s171
    %p178 = scmp.eq.s32.totalorder %s21, 1
    %p179 = por %p177, %p178
    %p180 = scmp.ne.s32.totalorder %s171, %s172
    %p181 = scmp.eq.s32.totalorder %s21, 0
    %p182 = por %p180, %p181
    %p183 = scmp.ne.s32.totalorder %s171, %s172
    %p184 = scmp.eq.s32.totalorder %s22, 1
    %p185 = por %p183, %p184
    %p187 = scmp.ne.s32.totalorder %s172, %s186
    %p188 = scmp.eq.s32.totalorder %s22, 0
    %p189 = por %p187, %p188
    %s190 = ssub.s32 %s24, %s31
    %s191 = ssub.s32 %s23, %s35
    %s192 = sor.u32 %s190, %s191
    %p193 = scmp.eq.s32.totalorder %s192, 0
    %s195 = sadd.s32 %s194, 1
    %s196 = scalar_select %p193, %s194, %s195
    %p199 = pneg %p193
    %p200 = scmp.eq.s32.totalorder %s16, 1
    %p201 = por %p199, %p200
    %p202 = scmp.ne.s32.totalorder %s194, %s197
    %p203 = scmp.eq.s32.totalorder %s16, 0
    %p204 = por %p202, %p203
    %p205 = scmp.ne.s32.totalorder %s194, %s197
    %p206 = scmp.eq.s32.totalorder %s21, 1
    %p207 = por %p205, %p206
    %p208 = scmp.ne.s32.totalorder %s197, %s198
    %p209 = scmp.eq.s32.totalorder %s21, 0
    %p210 = por %p208, %p209
    %p211 = scmp.ne.s32.totalorder %s197, %s198
    %p212 = scmp.eq.s32.totalorder %s22, 1
    %p213 = por %p211, %p212
    %p215 = scmp.ne.s32.totalorder %s198, %s214
    %p216 = scmp.eq.s32.totalorder %s22, 0
    %p217 = por %p215, %p216
    %s218 = ssub.s32 %s23, %s35
    %p219 = scmp.eq.s32.totalorder %s218, 0
    %s221 = sadd.s32 %s220, 1
    %s222 = scalar_select %p219, %s220, %s221
    %p225 = pneg %p219
    %p226 = scmp.eq.s32.totalorder %s16, 1
    %p227 = por %p225, %p226
    %p228 = scmp.ne.s32.totalorder %s220, %s223
    %p229 = scmp.eq.s32.totalorder %s16, 0
    %p230 = por %p228, %p229
    %p231 = scmp.ne.s32.totalorder %s220, %s223
    %p232 = scmp.eq.s32.totalorder %s21, 1
    %p233 = por %p231, %p232
    %p234 = scmp.ne.s32.totalorder %s223, %s224
    %p235 = scmp.eq.s32.totalorder %s21, 0
    %p236 = por %p234, %p235
    %p237 = scmp.ne.s32.totalorder %s223, %s224
    %p238 = scmp.eq.s32.totalorder %s22, 1
    %p239 = por %p237, %p238
    %p241 = scmp.ne.s32.totalorder %s224, %s240
    %p242 = scmp.eq.s32.totalorder %s22, 0
    %p243 = por %p241, %p242
    %s244 = ssub.s32 %s23, %s35
    %p245 = scmp.eq.s32.totalorder %s244, 0
    %s247 = sadd.s32 %s246, 1
    %s248 = scalar_select %p245, %s246, %s247
    %p251 = pneg %p245
    %p252 = scmp.eq.s32.totalorder %s16, 1
    %p253 = por %p251, %p252
    %p254 = scmp.ne.s32.totalorder %s246, %s249
    %p255 = scmp.eq.s32.totalorder %s16, 0
    %p256 = por %p254, %p255
    %p257 = scmp.ne.s32.totalorder %s246, %s249
    %p258 = scmp.eq.s32.totalorder %s21, 1
    %p259 = por %p257, %p258
    %p260 = scmp.ne.s32.totalorder %s249, %s250
    %p261 = scmp.eq.s32.totalorder %s21, 0
    %p262 = por %p260, %p261
    %p263 = scmp.ne.s32.totalorder %s249, %s250
    %p264 = scmp.eq.s32.totalorder %s22, 1
    %p265 = por %p263, %p264
    %p267 = scmp.ne.s32.totalorder %s250, %s266
    %p268 = scmp.eq.s32.totalorder %s22, 0
    %p269 = por %p267, %p268
    %p270 = scmp.le.s32.totalorder 1, %s16
    %p271 = scmp.lt.s32.totalorder %s16, 3
    %p272 = pnand %p270, %p271
    %p273 = pneg %p272
    // Predicated region
    $region9: #{rnn_compartment_forward.1} parent=5 // pred_check
      _
    $region10: #{rnn_compartment_forward.1} parent=5 // pred_check_branch
      %275 = sbr.rel (%p272) target = $region12
    $region11: #{rnn_compartment_forward.1} parent=5 // pred_region
      %s276 = ssub.s32 %s16, 1
      // Predicated region
      $region13: #{rnn_compartment_forward.1} parent=11 // pred_check
        %p277 = pneg %p77
      $region14: #{rnn_compartment_forward.1} parent=11 // pred_check_branch
        %279 = sbr.rel (%p277) target = $region16
      $region15: #{rnn_compartment_forward.1} parent=11 // pred_region
        _
      $region16: #{rnn_compartment_forward.1} parent=11 // pred_fallthru
        _
      // Predicated region
      $region17: #{rnn_compartment_forward.1} parent=11 // pred_check
        %p280 = pneg %p98
      $region18: #{rnn_compartment_forward.1} parent=11 // pred_check_branch
        %282 = sbr.rel (%p280) target = $region20
      $region19: #{rnn_compartment_forward.1} parent=11 // pred_region
        _
      $region20: #{rnn_compartment_forward.1} parent=11 // pred_fallthru
        _
      // Predicated region
      $region21: #{rnn_compartment_forward.1} parent=11 // pred_check
        %p283 = pneg %p119
      $region22: #{rnn_compartment_forward.1} parent=11 // pred_check_branch
        %285 = sbr.rel (%p283) target = $region24
      $region23: #{rnn_compartment_forward.1} parent=11 // pred_region
        _
      $region24: #{rnn_compartment_forward.1} parent=11 // pred_fallthru
        _
      // Predicated region
      $region25: #{rnn_compartment_forward.1} parent=11 // pred_check
        %p286 = pneg %p140
      $region26: #{rnn_compartment_forward.1} parent=11 // pred_check_branch
        %288 = sbr.rel (%p286) target = $region28
      $region27: #{rnn_compartment_forward.1} parent=11 // pred_region
        _
      $region28: #{rnn_compartment_forward.1} parent=11 // pred_fallthru
        _
      // Predicated region
      $region29: #{rnn_compartment_forward.1} parent=11 // pred_check
        %p289 = pneg %p161
      $region30: #{rnn_compartment_forward.1} parent=11 // pred_check_branch
        %291 = sbr.rel (%p289) target = $region32
      $region31: #{rnn_compartment_forward.1} parent=11 // pred_region
        _
      $region32: #{rnn_compartment_forward.1} parent=11 // pred_fallthru
        _
      // Predicated region
      $region33: #{rnn_compartment_forward.1} parent=11 // pred_check
        %p292 = pneg %p182
      $region34: #{rnn_compartment_forward.1} parent=11 // pred_check_branch
        %294 = sbr.rel (%p292) target = $region36
      $region35: #{rnn_compartment_forward.1} parent=11 // pred_region
        _
      $region36: #{rnn_compartment_forward.1} parent=11 // pred_fallthru
        _
    $region12: #{rnn_compartment_forward.1} parent=5 // pred_fallthru
      _
    %p295 = scmp.lt.s32.totalorder %s16, 2
    // Predicated region
    $region37: #{rnn_compartment_forward.1} parent=5 // pred_check
      %p296 = pneg %p295
    $region38: #{rnn_compartment_forward.1} parent=5 // pred_check_branch
      %298 = sbr.rel (%p296) target = $region40
    $region39: #{rnn_compartment_forward.1} parent=5 // pred_region
      // Predicated region
      $region41: #{rnn_compartment_forward.1} parent=39 // pred_check
        %p299 = pneg %p50
      $region42: #{rnn_compartment_forward.1} parent=39 // pred_check_branch
        %301 = sbr.rel (%p299) target = $region44
      $region43: #{rnn_compartment_forward.1} parent=39 // pred_region
        %s302 = smul.u32 4, %s24
        %p303 = scmp.lt.s32.totalorder %s302, 7
        %s304 = scalar_select %p303, %s302, 7
        %p305 = scmp.lt.s32.totalorder %s23, 0
        %s306 = scalar_select %p305, %s23, 0
        %s307 = sadd.s32 %s306, %s304
        %s308 = smul.addr %s307, 8
        %s309 = scalar_lea.vmem %s0, %s308
        %s310 = smul.u32 4, %s24
      $region44: #{rnn_compartment_forward.1} parent=39 // pred_fallthru
        _
    $region40: #{rnn_compartment_forward.1} parent=5 // pred_fallthru
      _
    %p311 = scmp.le.s32.totalorder 1, %s16
    %p312 = scmp.lt.s32.totalorder %s16, 3
    %p313 = pnand %p311, %p312
    %p314 = pneg %p313
    // Predicated region
    $region45: #{rnn_compartment_forward.1} parent=5 // pred_check
      _
    $region46: #{rnn_compartment_forward.1} parent=5 // pred_check_branch
      %316 = sbr.rel (%p313) target = $region48
    $region47: #{rnn_compartment_forward.1} parent=5 // pred_region
      %s317 = ssub.s32 %s16, 1
      %s318 = smul.u32 4, %s26
      %p319 = scmp.lt.s32.totalorder %s318, 7
      %s320 = scalar_select %p319, %s318, 7
      %p321 = scmp.lt.s32.totalorder %s25, 0
      %s322 = scalar_select %p321, %s25, 0
      %s323 = sadd.s32 %s322, %s320
      %s324 = smul.addr %s323, 8
      %s325 = scalar_lea.vmem %s0, %s324
      %p326 = pneg %p56
      %p327 = pneg %p53
      %p328 = pneg %p77
      %p329 = pneg %p74
      %p330 = pneg %p98
      %p331 = pneg %p95
      %p332 = pneg %p119
      %p333 = pneg %p116
      %p334 = pneg %p140
      %p335 = pneg %p137
      %p336 = pneg %p161
      %p337 = pneg %p158
      %p338 = pneg %p182
      %p339 = pneg %p179
      %p340 = pneg %p210
      %p341 = pneg %p207
      %s342 = smul.u32 4, %s26
      %p343 = scmp.lt.s32.totalorder %s342, 7
      %s344 = scalar_select %p343, %s342, 7
      %p345 = scmp.lt.s32.totalorder %s25, 0
      %s346 = scalar_select %p345, %s25, 0
      %s347 = sadd.s32 %s346, %s344
      %s348 = smul.addr %s347, 8
      %s349 = scalar_lea.vmem %s7, %s348
      %p350 = pneg %p236
      %p351 = pneg %p233
      %p352 = scmp.lt.s32.totalorder %s25, 0
      %s353 = scalar_select %p352, %s25, 0
      %s354 = smul.addr %s353, 8
      %s355 = scalar_lea.vmem %s8, %s354
      %p356 = pneg %p262
      %p357 = pneg %p259
      %p358 = scmp.lt.s32.totalorder %s25, 0
      %s359 = scalar_select %p358, %s25, 0
      %s360 = smul.addr %s359, 8
      %s361 = scalar_lea.vmem %s9, %s360
      %s362 = smul.u32 4, %s26
      %p363 = scmp.lt.s32.totalorder %s362, 7
      %s364 = scalar_select %p363, %s362, 7
      %p365 = scmp.lt.s32.totalorder %s25, 0
      %s366 = scalar_select %p365, %s25, 0
      %s367 = sadd.s32 %s366, %s364
      %s368 = smul.addr %s367, 8
      %s369 = scalar_lea.vmem %s0, %s368
      %s370 = smul.u32 4, %s26
      %s371 = smul.u32 4, %s26
      %p372 = scmp.lt.s32.totalorder %s371, 7
      %s373 = scalar_select %p372, %s371, 7
      %p374 = scmp.lt.s32.totalorder %s25, 0
      %s375 = scalar_select %p374, %s25, 0
      %s376 = sadd.s32 %s375, %s373
      %s377 = smul.addr %s376, 8
      %s378 = scalar_lea.vmem %s7, %s377
      %s379 = smul.u32 4, %s26
      %p380 = scmp.lt.s32.totalorder %s25, 0
      %s381 = scalar_select %p380, %s25, 0
      %s382 = smul.addr %s381, 8
      %s383 = scalar_lea.vmem %s8, %s382
      %p384 = scmp.lt.s32.totalorder %s25, 0
      %s385 = scalar_select %p384, %s25, 0
      %s386 = smul.addr %s385, 8
      %s387 = scalar_lea.vmem %s9, %s386
      %p389 = scmp.eq.s32.totalorder %s26, 0
      // Predicated region
      $region49: #{rnn_compartment_forward.1} parent=47 // pred_check
        %p390 = pneg %p389
      $region50: #{rnn_compartment_forward.1} parent=47 // pred_check_branch
        %392 = sbr.rel (%p390) target = $region52
      $region51: #{rnn_compartment_forward.1} parent=47 // pred_region
        %vm393 = vcmask 261120
        %394 = vst.msk [vmem:[#allocation4] sm:$0xff] %vm393, 0.0
        %395 = vst.msk [vmem:[#allocation4 + $0x8] sm:$0xff] %vm393, 0.0
        %396 = vst.msk [vmem:[#allocation5] sm:$0xff] %vm393, 0.0
        %397 = vst.msk [vmem:[#allocation5 + $0x8] sm:$0xff] %vm393, 0.0
      $region52: #{rnn_compartment_forward.1} parent=47 // pred_fallthru
        _
      %v398 = vld [vmem:[%s369] sm:$0xff]
      %v399 = vld [vmem:[%s369 + $0x8] sm:$0xff]
      %v400 = vld [vmem:[%s369 + $0x10] sm:$0xff]
      %v401 = vld [vmem:[%s369 + $0x18] sm:$0xff]
      %v402 = vld [vmem:[%s1] sm:$0xf]
      %v403 = vld [vmem:[%s1 + $0x4] sm:$0xf]
      %v404 = vld [vmem:[%s2] sm:$0xf]
      %v405 = vld [vmem:[%s2 + $0x4] sm:$0xf]
      %v406 = vld [vmem:[%s2 + $0x8] sm:$0xf]
      %v407 = vld [vmem:[%s2 + $0xc] sm:$0xf]
      %v408 = vld [vmem:[%s3] sm:$0x1]
      %v409 = vpack.c.bf16 %v399, %v398
      %v410 = vpack.c.bf16 %v401, %v400
      %v412 = vlaneseq
      %v413 = vshrl.u32 %v412, 7
      %v414 = vsub.s32 0, %v413
      %v415 = vrot.slane %v408, %v414
      %v419 = vunpack.c.l.b16 %v402
      %v420 = vunpack.c.l.b16 %v403
      %v421 = vpack.c.b16 %v420, %v419
      %vm423 = vcmask 130048
      %v425 = vsel %vm423, %v409, 0
      %v428 = vsel %vm423, %v410, 0
      %430 = vmatprep.subr.bf16.mxu0 0
      %431 = vmatpush1.bf16.msra.mxu0 %v421
      %432 = vmatprep.subr.bf16.mxu0 0
      %433 = vmatpush1.bf16.msra.mxu0 0
      %434 = vmatprep.subr.bf16.mxu0 0
      %435 = vmatpush1.bf16.msra.mxu0 0
      %436 = vmatprep.subr.bf16.mxu0 0
      %437 = vmatpush1.bf16.msra.mxu0 0
      %438 = vmatprep.subr.bf16.mxu0 0
      %439 = vmatpush1.bf16.msra.mxu0 0
      %440 = vmatprep.subr.bf16.mxu0 0
      %441 = vmatpush1.bf16.msra.mxu0 0
      %442 = vmatprep.subr.bf16.mxu0 0
      %443 = vmatpush1.bf16.msra.mxu0 0
      %444 = vmatprep.subr.bf16.mxu0 0
      %445 = vmatpush1.bf16.msra.mxu0 0
      %446 = vmatprep.subr.bf16.mxu0 0
      %447 = vmatpush1.bf16.msra.mxu0 0
      %448 = vmatprep.subr.bf16.mxu0 0
      %449 = vmatpush1.bf16.msra.mxu0 0
      %450 = vmatprep.subr.bf16.mxu0 0
      %451 = vmatpush1.bf16.msra.mxu0 0
      %452 = vmatprep.subr.bf16.mxu0 0
      %453 = vmatpush1.bf16.msra.mxu0 0
      %454 = vmatprep.subr.bf16.mxu0 0
      %455 = vmatpush1.bf16.msra.mxu0 0
      %456 = vmatprep.subr.bf16.mxu0 0
      %457 = vmatpush1.bf16.msra.mxu0 0
      %458 = vmatprep.subr.bf16.mxu0 0
      %459 = vmatpush1.bf16.msra.mxu0 0
      %460 = vmatprep.subr.bf16.mxu0 0
      %461 = vmatpush1.bf16.msra.mxu0 0
      %462 = vmatprep.mubr.bf16.mxu0 0
      %463 = vmatmul.mubr.bf16.gmra.mrb[0].mxu0 %v425
      %v464 = vpop.f32.mrb[0].mxu0
      %v465 = vadd.f32 %v415, %v464
      %v466 = vpop.f32.mrb[0].mxu0
      %v467 = vpop.f32.mrb[0].mxu0
      %v468 = vadd.f32 %v415, %v467
      %v469 = vpop.f32.mrb[0].mxu0
      %470 = vmatprep.mubr.bf16.mxu0 0
      %471 = vmatmul.mubr.bf16.gmra.mrb[0].mxu0 %v428
      %v472 = vpop.f32.mrb[0].mxu0
      %v473 = vadd.f32 %v415, %v472
      %v474 = vpop.f32.mrb[0].mxu0
      %v475 = vpop.f32.mrb[0].mxu0
      %v476 = vadd.f32 %v415, %v475
      %v477 = vpop.f32.mrb[0].mxu0
      %478 = vdwg.mxu0
      %479 = vst [vmem:[#allocation2] sm:$0xff] %v465
      %480 = vst [vmem:[#allocation2 + $0x8] sm:$0xff] %v468
      %481 = vst [vmem:[#allocation2 + $0x10] sm:$0xff] %v473
      %482 = vst [vmem:[#allocation2 + $0x18] sm:$0xff] %v476
      %v483 = vld [vmem:[#allocation4] sm:$0xff]
      %v484 = vld [vmem:[#allocation5] sm:$0xff]
      %v485 = vld [vmem:[#allocation2] sm:$0xff]
      %v486 = vpack.c.bf16 %v483, %v483
      %v491 = vunpack.c.l.b16 %v404
      %v492 = vunpack.c.l.b16 %v405
      %v493 = vunpack.c.l.b16 %v406
      %v494 = vunpack.c.l.b16 %v407
      %v495 = vpack.c.b16 %v492, %v491
      %v496 = vpack.c.b16 %v494, %v493
      %vm499 = vcmask 261120
      %v501 = vsel %vm499, %v486, 0
      %503 = vmatprep.subr.bf16.mxu0 0
      %504 = vmatpush1.bf16.msra.mxu0 %v495
      %505 = vmatprep.subr.bf16.mxu0 0
      %506 = vmatpush1.bf16.msra.mxu0 %v496
      %507 = vmatprep.subr.bf16.mxu0 0
      %508 = vmatpush1.bf16.msra.mxu0 0
      %509 = vmatprep.subr.bf16.mxu0 0
      %510 = vmatpush1.bf16.msra.mxu0 0
      %511 = vmatprep.subr.bf16.mxu0 0
      %512 = vmatpush1.bf16.msra.mxu0 0
      %513 = vmatprep.subr.bf16.mxu0 0
      %514 = vmatpush1.bf16.msra.mxu0 0
      %515 = vmatprep.subr.bf16.mxu0 0
      %516 = vmatpush1.bf16.msra.mxu0 0
      %517 = vmatprep.subr.bf16.mxu0 0
      %518 = vmatpush1.bf16.msra.mxu0 0
      %519 = vmatprep.subr.bf16.mxu0 0
      %520 = vmatpush1.bf16.msra.mxu0 0
      %521 = vmatprep.subr.bf16.mxu0 0
      %522 = vmatpush1.bf16.msra.mxu0 0
      %523 = vmatprep.subr.bf16.mxu0 0
      %524 = vmatpush1.bf16.msra.mxu0 0
      %525 = vmatprep.subr.bf16.mxu0 0
      %526 = vmatpush1.bf16.msra.mxu0 0
      %527 = vmatprep.subr.bf16.mxu0 0
      %528 = vmatpush1.bf16.msra.mxu0 0
      %529 = vmatprep.subr.bf16.mxu0 0
      %530 = vmatpush1.bf16.msra.mxu0 0
      %531 = vmatprep.subr.bf16.mxu0 0
      %532 = vmatpush1.bf16.msra.mxu0 0
      %533 = vmatprep.subr.bf16.mxu0 0
      %534 = vmatpush1.bf16.msra.mxu0 0
      %535 = vmatprep.mubr.bf16.mxu0 0
      %536 = vmatmul.mubr.bf16.gmra.mrb[0].mxu0 %v501
      %v537 = vpop.f32.mrb[0].mxu0
      %v538 = vadd.f32 0.0, %v537
      %v539 = vpop.f32.mrb[0].mxu0
      %v540 = vpop.f32.mrb[0].mxu0
      %v541 = vpop.f32.mrb[0].mxu0
      %542 = vdwg.mxu0
      %v543 = vadd.f32 %v485, %v538
      %v544 = vtanh.pop %v543
      %v545 = vadd.f32 %v544, 1.0
      %v546 = vmul.f32 %v545, 0.5
      %548 = vrot.lane.b32.xlu0 %v484, 32
      %v549 = vpop.permute.xlu0 %548
      %v551 = vmul.f32 %v546, %v549
      %553 = vrot.lane.b32.xlu0 %v544, 64
      %v554 = vpop.permute.xlu0 %553
      %v556 = vmul.f32 %v546, %v554
      %558 = vrot.lane.b32.xlu0 %v556, 32
      %v559 = vpop.permute.xlu0 %558
      %v561 = vadd.f32 %v551, %v559
      %v562 = vtanh.pop %v561
      %564 = vrot.lane.b32.xlu0 %v562, 64
      %v565 = vpop.permute.xlu0 %564
      %v567 = vmul.f32 %v546, %v565
      %569 = vrot.lane.b32.xlu0 %v567, 32
      %v570 = vpop.permute.xlu0 %569
      %572 = vst.msk [vmem:[#allocation3] sm:$0xff] %vm499, %v570
      %s573 = scalar_lea.vmem [#allocation2], 8
      %v574 = vld [vmem:[%s573] sm:$0xff]
      %v575 = vpack.c.bf16 %v567, %v567
      %577 = vrot.lane.b32.xlu0 %v575, 32
      %v578 = vpop.permute.xlu0 %577
      %v580 = vsel %vm499, %v578, 0
      %582 = vmatprep.subr.bf16.mxu0 0
      %583 = vmatpush1.bf16.msra.mxu0 %v495
      %584 = vmatprep.subr.bf16.mxu0 0
      %585 = vmatpush1.bf16.msra.mxu0 %v496
      %586 = vmatprep.subr.bf16.mxu0 0
      %587 = vmatpush1.bf16.msra.mxu0 0
      %588 = vmatprep.subr.bf16.mxu0 0
      %589 = vmatpush1.bf16.msra.mxu0 0
      %590 = vmatprep.subr.bf16.mxu0 0
      %591 = vmatpush1.bf16.msra.mxu0 0
      %592 = vmatprep.subr.bf16.mxu0 0
      %593 = vmatpush1.bf16.msra.mxu0 0
      %594 = vmatprep.subr.bf16.mxu0 0
      %595 = vmatpush1.bf16.msra.mxu0 0
      %596 = vmatprep.subr.bf16.mxu0 0
      %597 = vmatpush1.bf16.msra.mxu0 0
      %598 = vmatprep.subr.bf16.mxu0 0
      %599 = vmatpush1.bf16.msra.mxu0 0
      %600 = vmatprep.subr.bf16.mxu0 0
      %601 = vmatpush1.bf16.msra.mxu0 0
      %602 = vmatprep.subr.bf16.mxu0 0
      %603 = vmatpush1.bf16.msra.mxu0 0
      %604 = vmatprep.subr.bf16.mxu0 0
      %605 = vmatpush1.bf16.msra.mxu0 0
      %606 = vmatprep.subr.bf16.mxu0 0
      %607 = vmatpush1.bf16.msra.mxu0 0
      %608 = vmatprep.subr.bf16.mxu0 0
      %609 = vmatpush1.bf16.msra.mxu0 0
      %610 = vmatprep.subr.bf16.mxu0 0
      %611 = vmatpush1.bf16.msra.mxu0 0
      %612 = vmatprep.subr.bf16.mxu0 0
      %613 = vmatpush1.bf16.msra.mxu0 0
      %614 = vmatprep.mubr.bf16.mxu0 0
      %615 = vmatmul.mubr.bf16.gmra.mrb[0].mxu0 %v580
      %v616 = vpop.f32.mrb[0].mxu0
      %v617 = vadd.f32 0.0, %v616
      %v618 = vpop.f32.mrb[0].mxu0
      %v619 = vpop.f32.mrb[0].mxu0
      %v620 = vpop.f32.mrb[0].mxu0
      %621 = vdwg.mxu0
      %v622 = vadd.f32 %v574, %v617
      %v623 = vtanh.pop %v622
      %v624 = vadd.f32 %v623, 1.0
      %v625 = vmul.f32 %v624, 0.5
      %v626 = vmul.f32 %v625, %v561
      %628 = vrot.lane.b32.xlu0 %v623, 64
      %v629 = vpop.permute.xlu0 %628
      %v631 = vmul.f32 %v625, %v629
      %633 = vrot.lane.b32.xlu0 %v631, 32
      %v634 = vpop.permute.xlu0 %633
      %v636 = vadd.f32 %v626, %v634
      %v637 = vtanh.pop %v636
      %639 = vrot.lane.b32.xlu0 %v637, 64
      %v640 = vpop.permute.xlu0 %639
      %v642 = vmul.f32 %v625, %v640
      %644 = vrot.lane.b32.xlu0 %v642, 32
      %v645 = vpop.permute.xlu0 %644
      %s647 = scalar_lea.vmem [#allocation3], 8
      %648 = vst.msk [vmem:[%s647] sm:$0xff] %vm499, %v645
      %s649 = scalar_lea.vmem [#allocation2], 16
      %v650 = vld [vmem:[%s649] sm:$0xff]
      %v651 = vpack.c.bf16 %v642, %v642
      %653 = vrot.lane.b32.xlu0 %v651, 32
      %v654 = vpop.permute.xlu0 %653
      %v656 = vsel %vm499, %v654, 0
      %658 = vmatprep.subr.bf16.mxu0 0
      %659 = vmatpush1.bf16.msra.mxu0 %v495
      %660 = vmatprep.subr.bf16.mxu0 0
      %661 = vmatpush1.bf16.msra.mxu0 %v496
      %662 = vmatprep.subr.bf16.mxu0 0
      %663 = vmatpush1.bf16.msra.mxu0 0
      %664 = vmatprep.subr.bf16.mxu0 0
      %665 = vmatpush1.bf16.msra.mxu0 0
      %666 = vmatprep.subr.bf16.mxu0 0
      %667 = vmatpush1.bf16.msra.mxu0 0
      %668 = vmatprep.subr.bf16.mxu0 0
      %669 = vmatpush1.bf16.msra.mxu0 0
      %670 = vmatprep.subr.bf16.mxu0 0
      %671 = vmatpush1.bf16.msra.mxu0 0
      %672 = vmatprep.subr.bf16.mxu0 0
      %673 = vmatpush1.bf16.msra.mxu0 0
      %674 = vmatprep.subr.bf16.mxu0 0
      %675 = vmatpush1.bf16.msra.mxu0 0
      %676 = vmatprep.subr.bf16.mxu0 0
      %677 = vmatpush1.bf16.msra.mxu0 0
      %678 = vmatprep.subr.bf16.mxu0 0
      %679 = vmatpush1.bf16.msra.mxu0 0
      %680 = vmatprep.subr.bf16.mxu0 0
      %681 = vmatpush1.bf16.msra.mxu0 0
      %682 = vmatprep.subr.bf16.mxu0 0
      %683 = vmatpush1.bf16.msra.mxu0 0
      %684 = vmatprep.subr.bf16.mxu0 0
      %685 = vmatpush1.bf16.msra.mxu0 0
      %686 = vmatprep.subr.bf16.mxu0 0
      %687 = vmatpush1.bf16.msra.mxu0 0
      %688 = vmatprep.subr.bf16.mxu0 0
      %689 = vmatpush1.bf16.msra.mxu0 0
      %690 = vmatprep.mubr.bf16.mxu0 0
      %691 = vmatmul.mubr.bf16.gmra.mrb[0].mxu0 %v656
      %v692 = vpop.f32.mrb[0].mxu0
      %v693 = vadd.f32 0.0, %v692
      %v694 = vpop.f32.mrb[0].mxu0
      %v695 = vpop.f32.mrb[0].mxu0
      %v696 = vpop.f32.mrb[0].mxu0
      %697 = vdwg.mxu0
      %v698 = vadd.f32 %v650, %v693
      %v699 = vtanh.pop %v698
      %v700 = vadd.f32 %v699, 1.0
      %v701 = vmul.f32 %v700, 0.5
      %v702 = vmul.f32 %v701, %v636
      %704 = vrot.lane.b32.xlu0 %v699, 64
      %v705 = vpop.permute.xlu0 %704
      %v707 = vmul.f32 %v701, %v705
      %709 = vrot.lane.b32.xlu0 %v707, 32
      %v710 = vpop.permute.xlu0 %709
      %v712 = vadd.f32 %v702, %v710
      %v713 = vtanh.pop %v712
      %715 = vrot.lane.b32.xlu0 %v713, 64
      %v716 = vpop.permute.xlu0 %715
      %v718 = vmul.f32 %v701, %v716
      %720 = vrot.lane.b32.xlu0 %v718, 32
      %v721 = vpop.permute.xlu0 %720
      %s723 = scalar_lea.vmem [#allocation3], 16
      %724 = vst.msk [vmem:[%s723] sm:$0xff] %vm499, %v721
      %s725 = scalar_lea.vmem [#allocation2], 24
      %v726 = vld [vmem:[%s725] sm:$0xff]
      %v727 = vpack.c.bf16 %v718, %v718
      %729 = vrot.lane.b32.xlu0 %v727, 32
      %v730 = vpop.permute.xlu0 %729
      %v732 = vsel %vm499, %v730, 0
      %734 = vmatprep.subr.bf16.mxu0 0
      %735 = vmatpush1.bf16.msra.mxu0 %v495
      %736 = vmatprep.subr.bf16.mxu0 0
      %737 = vmatpush1.bf16.msra.mxu0 %v496
      %738 = vmatprep.subr.bf16.mxu0 0
      %739 = vmatpush1.bf16.msra.mxu0 0
      %740 = vmatprep.subr.bf16.mxu0 0
      %741 = vmatpush1.bf16.msra.mxu0 0
      %742 = vmatprep.subr.bf16.mxu0 0
      %743 = vmatpush1.bf16.msra.mxu0 0
      %744 = vmatprep.subr.bf16.mxu0 0
      %745 = vmatpush1.bf16.msra.mxu0 0
      %746 = vmatprep.subr.bf16.mxu0 0
      %747 = vmatpush1.bf16.msra.mxu0 0
      %748 = vmatprep.subr.bf16.mxu0 0
      %749 = vmatpush1.bf16.msra.mxu0 0
      %750 = vmatprep.subr.bf16.mxu0 0
      %751 = vmatpush1.bf16.msra.mxu0 0
      %752 = vmatprep.subr.bf16.mxu0 0
      %753 = vmatpush1.bf16.msra.mxu0 0
      %754 = vmatprep.subr.bf16.mxu0 0
      %755 = vmatpush1.bf16.msra.mxu0 0
      %756 = vmatprep.subr.bf16.mxu0 0
      %757 = vmatpush1.bf16.msra.mxu0 0
      %758 = vmatprep.subr.bf16.mxu0 0
      %759 = vmatpush1.bf16.msra.mxu0 0
      %760 = vmatprep.subr.bf16.mxu0 0
      %761 = vmatpush1.bf16.msra.mxu0 0
      %762 = vmatprep.subr.bf16.mxu0 0
      %763 = vmatpush1.bf16.msra.mxu0 0
      %764 = vmatprep.subr.bf16.mxu0 0
      %765 = vmatpush1.bf16.msra.mxu0 0
      %766 = vmatprep.mubr.bf16.mxu0 0
      %767 = vmatmul.mubr.bf16.gmra.mrb[0].mxu0 %v732
      %v768 = vpop.f32.mrb[0].mxu0
      %v769 = vadd.f32 0.0, %v768
      %v770 = vpop.f32.mrb[0].mxu0
      %v771 = vpop.f32.mrb[0].mxu0
      %v772 = vpop.f32.mrb[0].mxu0
      %773 = vdwg.mxu0
      %v774 = vadd.f32 %v726, %v769
      %v775 = vtanh.pop %v774
      %v776 = vadd.f32 %v775, 1.0
      %v777 = vmul.f32 %v776, 0.5
      %v778 = vmul.f32 %v777, %v712
      %780 = vrot.lane.b32.xlu0 %v775, 64
      %v781 = vpop.permute.xlu0 %780
      %v783 = vmul.f32 %v777, %v781
      %785 = vrot.lane.b32.xlu0 %v783, 32
      %v786 = vpop.permute.xlu0 %785
      %v788 = vadd.f32 %v778, %v786
      %v789 = vtanh.pop %v788
      %791 = vrot.lane.b32.xlu0 %v789, 64
      %v792 = vpop.permute.xlu0 %791
      %v794 = vmul.f32 %v777, %v792
      %796 = vrot.lane.b32.xlu0 %v794, 32
      %v797 = vpop.permute.xlu0 %796
      %s799 = scalar_lea.vmem [#allocation3], 24
      %800 = vst.msk [vmem:[%s799] sm:$0xff] %vm499, %v797
      %801 = vst.msk [vmem:[#allocation4] sm:$0xff] %vm499, %v797
      %803 = vrot.lane.b32.xlu0 %v788, 96
      %v804 = vpop.permute.xlu0 %803
      %806 = vst.msk [vmem:[#allocation5] sm:$0xff] %vm499, %v804
      %v807 = vld [vmem:[#allocation3] sm:$0xff]
      %v808 = vld [vmem:[#allocation3 + $0x8] sm:$0xff]
      %v809 = vld [vmem:[#allocation3 + $0x10] sm:$0xff]
      %v810 = vld [vmem:[#allocation3 + $0x18] sm:$0xff]
      %v811 = vld [vmem:[%s4] sm:$0xf]
      %v812 = vld [vmem:[%s4 + $0x4] sm:$0xf]
      %v813 = vld [vmem:[%s4 + $0x8] sm:$0xf]
      %v814 = vld [vmem:[%s4 + $0xc] sm:$0xf]
      %v815 = vld [vmem:[%s5] sm:$0xf]
      %v816 = vld [vmem:[%s5 + $0x4] sm:$0xf]
      %v817 = vld [vmem:[%s5 + $0x8] sm:$0xf]
      %v818 = vld [vmem:[%s5 + $0xc] sm:$0xf]
      %v819 = vld [vmem:[%s6] sm:$0x1]
      %v820 = vpack.c.bf16 %v808, %v807
      %v821 = vpack.c.bf16 %v810, %v809
      %v823 = vlaneseq
      %v824 = vshrl.u32 %v823, 7
      %v825 = vsub.s32 0, %v824
      %v826 = vrot.slane %v819, %v825
      %v832 = vunpack.c.l.b16 %v811
      %v833 = vunpack.c.l.b16 %v812
      %v834 = vunpack.c.l.b16 %v813
      %v835 = vunpack.c.l.b16 %v814
      %v836 = vpack.c.b16 %v833, %v832
      %v837 = vpack.c.b16 %v835, %v834
      %v841 = vsel %vm499, %v820, 0
      %v844 = vsel %vm499, %v821, 0
      %846 = vmatprep.subr.bf16.mxu0 0
      %847 = vmatpush1.bf16.msra.mxu0 %v836
      %848 = vmatprep.subr.bf16.mxu0 0
      %849 = vmatpush1.bf16.msra.mxu0 %v837
      %850 = vmatprep.subr.bf16.mxu0 0
      %851 = vmatpush1.bf16.msra.mxu0 0
      %852 = vmatprep.subr.bf16.mxu0 0
      %853 = vmatpush1.bf16.msra.mxu0 0
      %854 = vmatprep.subr.bf16.mxu0 0
      %855 = vmatpush1.bf16.msra.mxu0 0
      %856 = vmatprep.subr.bf16.mxu0 0
      %857 = vmatpush1.bf16.msra.mxu0 0
      %858 = vmatprep.subr.bf16.mxu0 0
      %859 = vmatpush1.bf16.msra.mxu0 0
      %860 = vmatprep.subr.bf16.mxu0 0
      %861 = vmatpush1.bf16.msra.mxu0 0
      %862 = vmatprep.subr.bf16.mxu0 0
      %863 = vmatpush1.bf16.msra.mxu0 0
      %864 = vmatprep.subr.bf16.mxu0 0
      %865 = vmatpush1.bf16.msra.mxu0 0
      %866 = vmatprep.subr.bf16.mxu0 0
      %867 = vmatpush1.bf16.msra.mxu0 0
      %868 = vmatprep.subr.bf16.mxu0 0
      %869 = vmatpush1.bf16.msra.mxu0 0
      %870 = vmatprep.subr.bf16.mxu0 0
      %871 = vmatpush1.bf16.msra.mxu0 0
      %872 = vmatprep.subr.bf16.mxu0 0
      %873 = vmatpush1.bf16.msra.mxu0 0
      %874 = vmatprep.subr.bf16.mxu0 0
      %875 = vmatpush1.bf16.msra.mxu0 0
      %876 = vmatprep.subr.bf16.mxu0 0
      %877 = vmatpush1.bf16.msra.mxu0 0
      %878 = vmatprep.mubr.bf16.mxu0 0
      %879 = vmatmul.mubr.bf16.gmra.mrb[0].mxu0 %v841
      %v880 = vpop.f32.mrb[0].mxu0
      %v881 = vadd.f32 %v826, %v880
      %v882 = vpop.f32.mrb[0].mxu0
      %v883 = vpop.f32.mrb[0].mxu0
      %v884 = vadd.f32 %v826, %v883
      %v885 = vpop.f32.mrb[0].mxu0
      %886 = vmatprep.mubr.bf16.mxu0 0
      %887 = vmatmul.mubr.bf16.gmra.mrb[0].mxu0 %v844
      %v888 = vpop.f32.mrb[0].mxu0
      %v889 = vadd.f32 %v826, %v888
      %v890 = vpop.f32.mrb[0].mxu0
      %v891 = vpop.f32.mrb[0].mxu0
      %v892 = vadd.f32 %v826, %v891
      %v893 = vpop.f32.mrb[0].mxu0
      %894 = vdwg.mxu0
      %895 = vst [vmem:[#allocation2] sm:$0xff] %v881
      %896 = vst [vmem:[#allocation2 + $0x8] sm:$0xff] %v884
      %897 = vst [vmem:[#allocation2 + $0x10] sm:$0xff] %v889
      %898 = vst [vmem:[#allocation2 + $0x18] sm:$0xff] %v892
      %s899 = scalar_lea.vmem [#allocation4], 8
      %v900 = vld [vmem:[%s899] sm:$0xff]
      %s901 = scalar_lea.vmem [#allocation5], 8
      %v902 = vld [vmem:[%s901] sm:$0xff]
      %v903 = vld [vmem:[#allocation2] sm:$0xff]
      %v904 = vpack.c.bf16 %v900, %v900
      %v909 = vunpack.c.l.b16 %v815
      %v910 = vunpack.c.l.b16 %v816
      %v911 = vunpack.c.l.b16 %v817
      %v912 = vunpack.c.l.b16 %v818
      %v913 = vpack.c.b16 %v910, %v909
      %v914 = vpack.c.b16 %v912, %v911
      %v918 = vsel %vm499, %v904, 0
      %920 = vmatprep.subr.bf16.mxu0 0
      %921 = vmatpush1.bf16.msra.mxu0 %v913
      %922 = vmatprep.subr.bf16.mxu0 0
      %923 = vmatpush1.bf16.msra.mxu0 %v914
      %924 = vmatprep.subr.bf16.mxu0 0
      %925 = vmatpush1.bf16.msra.mxu0 0
      %926 = vmatprep.subr.bf16.mxu0 0
      %927 = vmatpush1.bf16.msra.mxu0 0
      %928 = vmatprep.subr.bf16.mxu0 0
      %929 = vmatpush1.bf16.msra.mxu0 0
      %930 = vmatprep.subr.bf16.mxu0 0
      %931 = vmatpush1.bf16.msra.mxu0 0
      %932 = vmatprep.subr.bf16.mxu0 0
      %933 = vmatpush1.bf16.msra.mxu0 0
      %934 = vmatprep.subr.bf16.mxu0 0
      %935 = vmatpush1.bf16.msra.mxu0 0
      %936 = vmatprep.subr.bf16.mxu0 0
      %937 = vmatpush1.bf16.msra.mxu0 0
      %938 = vmatprep.subr.bf16.mxu0 0
      %939 = vmatpush1.bf16.msra.mxu0 0
      %940 = vmatprep.subr.bf16.mxu0 0
      %941 = vmatpush1.bf16.msra.mxu0 0
      %942 = vmatprep.subr.bf16.mxu0 0
      %943 = vmatpush1.bf16.msra.mxu0 0
      %944 = vmatprep.subr.bf16.mxu0 0
      %945 = vmatpush1.bf16.msra.mxu0 0
      %946 = vmatprep.subr.bf16.mxu0 0
      %947 = vmatpush1.bf16.msra.mxu0 0
      %948 = vmatprep.subr.bf16.mxu0 0
      %949 = vmatpush1.bf16.msra.mxu0 0
      %950 = vmatprep.subr.bf16.mxu0 0
      %951 = vmatpush1.bf16.msra.mxu0 0
      %952 = vmatprep.mubr.bf16.mxu0 0
      %953 = vmatmul.mubr.bf16.gmra.mrb[0].mxu0 %v918
      %v954 = vpop.f32.mrb[0].mxu0
      %v955 = vadd.f32 0.0, %v954
      %v956 = vpop.f32.mrb[0].mxu0
      %v957 = vpop.f32.mrb[0].mxu0
      %v958 = vpop.f32.mrb[0].mxu0
      %959 = vdwg.mxu0
      %v960 = vadd.f32 %v903, %v955
      %v961 = vtanh.pop %v960
      %v962 = vadd.f32 %v961, 1.0
      %v963 = vmul.f32 %v962, 0.5
      %965 = vrot.lane.b32.xlu0 %v902, 32
      %v966 = vpop.permute.xlu0 %965
      %v968 = vmul.f32 %v963, %v966
      %970 = vrot.lane.b32.xlu0 %v961, 64
      %v971 = vpop.permute.xlu0 %970
      %v973 = vmul.f32 %v963, %v971
      %975 = vrot.lane.b32.xlu0 %v973, 32
      %v976 = vpop.permute.xlu0 %975
      %v978 = vadd.f32 %v968, %v976
      %v979 = vtanh.pop %v978
      %981 = vrot.lane.b32.xlu0 %v979, 64
      %v982 = vpop.permute.xlu0 %981
      %v984 = vmul.f32 %v963, %v982
      %986 = vrot.lane.b32.xlu0 %v984, 32
      %v987 = vpop.permute.xlu0 %986
      %989 = vst.msk [vmem:[%s378] sm:$0xff] %vm499, %v987
      %v990 = vld [vmem:[%s573] sm:$0xff]
      %v991 = vpack.c.bf16 %v984, %v984
      %993 = vrot.lane.b32.xlu0 %v991, 32
      %v994 = vpop.permute.xlu0 %993
      %v996 = vsel %vm499, %v994, 0
      %998 = vmatprep.subr.bf16.mxu0 0
      %999 = vmatpush1.bf16.msra.mxu0 %v913
      %1000 = vmatprep.subr.bf16.mxu0 0
      %1001 = vmatpush1.bf16.msra.mxu0 %v914
      %1002 = vmatprep.subr.bf16.mxu0 0
      %1003 = vmatpush1.bf16.msra.mxu0 0
      %1004 = vmatprep.subr.bf16.mxu0 0
      %1005 = vmatpush1.bf16.msra.mxu0 0
      %1006 = vmatprep.subr.bf16.mxu0 0
      %1007 = vmatpush1.bf16.msra.mxu0 0
      %1008 = vmatprep.subr.bf16.mxu0 0
      %1009 = vmatpush1.bf16.msra.mxu0 0
      %1010 = vmatprep.subr.bf16.mxu0 0
      %1011 = vmatpush1.bf16.msra.mxu0 0
      %1012 = vmatprep.subr.bf16.mxu0 0
      %1013 = vmatpush1.bf16.msra.mxu0 0
      %1014 = vmatprep.subr.bf16.mxu0 0
      %1015 = vmatpush1.bf16.msra.mxu0 0
      %1016 = vmatprep.subr.bf16.mxu0 0
      %1017 = vmatpush1.bf16.msra.mxu0 0
      %1018 = vmatprep.subr.bf16.mxu0 0
      %1019 = vmatpush1.bf16.msra.mxu0 0
      %1020 = vmatprep.subr.bf16.mxu0 0
      %1021 = vmatpush1.bf16.msra.mxu0 0
      %1022 = vmatprep.subr.bf16.mxu0 0
      %1023 = vmatpush1.bf16.msra.mxu0 0
      %1024 = vmatprep.subr.bf16.mxu0 0
      %1025 = vmatpush1.bf16.msra.mxu0 0
      %1026 = vmatprep.subr.bf16.mxu0 0
      %1027 = vmatpush1.bf16.msra.mxu0 0
      %1028 = vmatprep.subr.bf16.mxu0 0
      %1029 = vmatpush1.bf16.msra.mxu0 0
      %1030 = vmatprep.mubr.bf16.mxu0 0
      %1031 = vmatmul.mubr.bf16.gmra.mrb[0].mxu0 %v996
      %v1032 = vpop.f32.mrb[0].mxu0
      %v1033 = vadd.f32 0.0, %v1032
      %v1034 = vpop.f32.mrb[0].mxu0
      %v1035 = vpop.f32.mrb[0].mxu0
      %v1036 = vpop.f32.mrb[0].mxu0
      %1037 = vdwg.mxu0
      %v1038 = vadd.f32 %v990, %v1033
      %v1039 = vtanh.pop %v1038
      %v1040 = vadd.f32 %v1039, 1.0
      %v1041 = vmul.f32 %v1040, 0.5
      %v1042 = vmul.f32 %v1041, %v978
      %1044 = vrot.lane.b32.xlu0 %v1039, 64
      %v1045 = vpop.permute.xlu0 %1044
      %v1047 = vmul.f32 %v1041, %v1045
      %1049 = vrot.lane.b32.xlu0 %v1047, 32
      %v1050 = vpop.permute.xlu0 %1049
      %v1052 = vadd.f32 %v1042, %v1050
      %v1053 = vtanh.pop %v1052
      %1055 = vrot.lane.b32.xlu0 %v1053, 64
      %v1056 = vpop.permute.xlu0 %1055
      %v1058 = vmul.f32 %v1041, %v1056
      %1060 = vrot.lane.b32.xlu0 %v1058, 32
      %v1061 = vpop.permute.xlu0 %1060
      %s1063 = scalar_lea.vmem %s378, 8
      %1064 = vst.msk [vmem:[%s1063] sm:$0xff] %vm499, %v1061
      %v1065 = vld [vmem:[%s649] sm:$0xff]
      %v1066 = vpack.c.bf16 %v1058, %v1058
      %1068 = vrot.lane.b32.xlu0 %v1066, 32
      %v1069 = vpop.permute.xlu0 %1068
      %v1071 = vsel %vm499, %v1069, 0
      %1073 = vmatprep.subr.bf16.mxu0 0
      %1074 = vmatpush1.bf16.msra.mxu0 %v913
      %1075 = vmatprep.subr.bf16.mxu0 0
      %1076 = vmatpush1.bf16.msra.mxu0 %v914
      %1077 = vmatprep.subr.bf16.mxu0 0
      %1078 = vmatpush1.bf16.msra.mxu0 0
      %1079 = vmatprep.subr.bf16.mxu0 0
      %1080 = vmatpush1.bf16.msra.mxu0 0
      %1081 = vmatprep.subr.bf16.mxu0 0
      %1082 = vmatpush1.bf16.msra.mxu0 0
      %1083 = vmatprep.subr.bf16.mxu0 0
      %1084 = vmatpush1.bf16.msra.mxu0 0
      %1085 = vmatprep.subr.bf16.mxu0 0
      %1086 = vmatpush1.bf16.msra.mxu0 0
      %1087 = vmatprep.subr.bf16.mxu0 0
      %1088 = vmatpush1.bf16.msra.mxu0 0
      %1089 = vmatprep.subr.bf16.mxu0 0
      %1090 = vmatpush1.bf16.msra.mxu0 0
      %1091 = vmatprep.subr.bf16.mxu0 0
      %1092 = vmatpush1.bf16.msra.mxu0 0
      %1093 = vmatprep.subr.bf16.mxu0 0
      %1094 = vmatpush1.bf16.msra.mxu0 0
      %1095 = vmatprep.subr.bf16.mxu0 0
      %1096 = vmatpush1.bf16.msra.mxu0 0
      %1097 = vmatprep.subr.bf16.mxu0 0
      %1098 = vmatpush1.bf16.msra.mxu0 0
      %1099 = vmatprep.subr.bf16.mxu0 0
      %1100 = vmatpush1.bf16.msra.mxu0 0
      %1101 = vmatprep.subr.bf16.mxu0 0
      %1102 = vmatpush1.bf16.msra.mxu0 0
      %1103 = vmatprep.subr.bf16.mxu0 0
      %1104 = vmatpush1.bf16.msra.mxu0 0
      %1105 = vmatprep.mubr.bf16.mxu0 0
      %1106 = vmatmul.mubr.bf16.gmra.mrb[0].mxu0 %v1071
      %v1107 = vpop.f32.mrb[0].mxu0
      %v1108 = vadd.f32 0.0, %v1107
      %v1109 = vpop.f32.mrb[0].mxu0
      %v1110 = vpop.f32.mrb[0].mxu0
      %v1111 = vpop.f32.mrb[0].mxu0
      %1112 = vdwg.mxu0
      %v1113 = vadd.f32 %v1065, %v1108
      %v1114 = vtanh.pop %v1113
      %v1115 = vadd.f32 %v1114, 1.0
      %v1116 = vmul.f32 %v1115, 0.5
      %v1117 = vmul.f32 %v1116, %v1052
      %1119 = vrot.lane.b32.xlu0 %v1114, 64
      %v1120 = vpop.permute.xlu0 %1119
      %v1122 = vmul.f32 %v1116, %v1120
      %1124 = vrot.lane.b32.xlu0 %v1122, 32
      %v1125 = vpop.permute.xlu0 %1124
      %v1127 = vadd.f32 %v1117, %v1125
      %v1128 = vtanh.pop %v1127
      %1130 = vrot.lane.b32.xlu0 %v1128, 64
      %v1131 = vpop.permute.xlu0 %1130
      %v1133 = vmul.f32 %v1116, %v1131
      %1135 = vrot.lane.b32.xlu0 %v1133, 32
      %v1136 = vpop.permute.xlu0 %1135
      %s1138 = scalar_lea.vmem %s378, 16
      %1139 = vst.msk [vmem:[%s1138] sm:$0xff] %vm499, %v1136
      %v1140 = vld [vmem:[%s725] sm:$0xff]
      %v1141 = vpack.c.bf16 %v1133, %v1133
      %1143 = vrot.lane.b32.xlu0 %v1141, 32
      %v1144 = vpop.permute.xlu0 %1143
      %v1146 = vsel %vm499, %v1144, 0
      %1148 = vmatprep.subr.bf16.mxu0 0
      %1149 = vmatpush1.bf16.msra.mxu0 %v913
      %1150 = vmatprep.subr.bf16.mxu0 0
      %1151 = vmatpush1.bf16.msra.mxu0 %v914
      %1152 = vmatprep.subr.bf16.mxu0 0
      %1153 = vmatpush1.bf16.msra.mxu0 0
      %1154 = vmatprep.subr.bf16.mxu0 0
      %1155 = vmatpush1.bf16.msra.mxu0 0
      %1156 = vmatprep.subr.bf16.mxu0 0
      %1157 = vmatpush1.bf16.msra.mxu0 0
      %1158 = vmatprep.subr.bf16.mxu0 0
      %1159 = vmatpush1.bf16.msra.mxu0 0
      %1160 = vmatprep.subr.bf16.mxu0 0
      %1161 = vmatpush1.bf16.msra.mxu0 0
      %1162 = vmatprep.subr.bf16.mxu0 0
      %1163 = vmatpush1.bf16.msra.mxu0 0
      %1164 = vmatprep.subr.bf16.mxu0 0
      %1165 = vmatpush1.bf16.msra.mxu0 0
      %1166 = vmatprep.subr.bf16.mxu0 0
      %1167 = vmatpush1.bf16.msra.mxu0 0
      %1168 = vmatprep.subr.bf16.mxu0 0
      %1169 = vmatpush1.bf16.msra.mxu0 0
      %1170 = vmatprep.subr.bf16.mxu0 0
      %1171 = vmatpush1.bf16.msra.mxu0 0
      %1172 = vmatprep.subr.bf16.mxu0 0
      %1173 = vmatpush1.bf16.msra.mxu0 0
      %1174 = vmatprep.subr.bf16.mxu0 0
      %1175 = vmatpush1.bf16.msra.mxu0 0
      %1176 = vmatprep.subr.bf16.mxu0 0
      %1177 = vmatpush1.bf16.msra.mxu0 0
      %1178 = vmatprep.subr.bf16.mxu0 0
      %1179 = vmatpush1.bf16.msra.mxu0 0
      %1180 = vmatprep.mubr.bf16.mxu0 0
      %1181 = vmatmul.mubr.bf16.gmra.mrb[0].mxu0 %v1146
      %v1182 = vpop.f32.mrb[0].mxu0
      %v1183 = vadd.f32 0.0, %v1182
      %v1184 = vpop.f32.mrb[0].mxu0
      %v1185 = vpop.f32.mrb[0].mxu0
      %v1186 = vpop.f32.mrb[0].mxu0
      %1187 = vdwg.mxu0
      %v1188 = vadd.f32 %v1140, %v1183
      %v1189 = vtanh.pop %v1188
      %v1190 = vadd.f32 %v1189, 1.0
      %v1191 = vmul.f32 %v1190, 0.5
      %v1192 = vmul.f32 %v1191, %v1127
      %1194 = vrot.lane.b32.xlu0 %v1189, 64
      %v1195 = vpop.permute.xlu0 %1194
      %v1197 = vmul.f32 %v1191, %v1195
      %1199 = vrot.lane.b32.xlu0 %v1197, 32
      %v1200 = vpop.permute.xlu0 %1199
      %v1202 = vadd.f32 %v1192, %v1200
      %v1203 = vtanh.pop %v1202
      %1205 = vrot.lane.b32.xlu0 %v1203, 64
      %v1206 = vpop.permute.xlu0 %1205
      %v1208 = vmul.f32 %v1191, %v1206
      %1210 = vrot.lane.b32.xlu0 %v1208, 32
      %v1211 = vpop.permute.xlu0 %1210
      %s1213 = scalar_lea.vmem %s378, 24
      %1214 = vst.msk [vmem:[%s1213] sm:$0xff] %vm499, %v1211
      %1215 = vst.msk [vmem:[%s899] sm:$0xff] %vm499, %v1211
      %1217 = vrot.lane.b32.xlu0 %v1202, 96
      %v1218 = vpop.permute.xlu0 %1217
      %1220 = vst.msk [vmem:[%s901] sm:$0xff] %vm499, %v1218
      %p1221 = scmp.eq.s32.totalorder %s26, 1
      // Predicated region
      $region53: #{rnn_compartment_forward.1} parent=47 // pred_check
        %p1222 = pneg %p1221
      $region54: #{rnn_compartment_forward.1} parent=47 // pred_check_branch
        %1224 = sbr.rel (%p1222) target = $region56
      $region55: #{rnn_compartment_forward.1} parent=47 // pred_region
        %v1225 = vld [vmem:[#allocation4] sm:$0xff]
        %v1226 = vld [vmem:[#allocation4 + $0x8] sm:$0xff]
        %1227 = vst.msk [vmem:[%s383] sm:$0xff] %vm499, %v1225
        %1228 = vst.msk [vmem:[%s383 + $0x8] sm:$0xff] %vm499, %v1226
        %v1229 = vld [vmem:[#allocation5] sm:$0xff]
        %v1230 = vld [vmem:[#allocation5 + $0x8] sm:$0xff]
        %1231 = vst.msk [vmem:[%s387] sm:$0xff] %vm499, %v1229
        %1232 = vst.msk [vmem:[%s387 + $0x8] sm:$0xff] %vm499, %v1230
      $region56: #{rnn_compartment_forward.1} parent=47 // pred_fallthru
        _
      %s1233 = smul.u32 4, %s26
      %p1234 = scmp.lt.s32.totalorder %s1233, 7
      %s1235 = scalar_select %p1234, %s1233, 7
      %p1236 = scmp.lt.s32.totalorder %s25, 0
      %s1237 = scalar_select %p1236, %s25, 0
      %s1238 = sadd.s32 %s1237, %s1235
      %s1239 = smul.addr %s1238, 8
      %s1240 = scalar_lea.vmem %s7, %s1239
      %p1241 = scmp.lt.s32.totalorder %s25, 0
      %s1242 = scalar_select %p1241, %s25, 0
      %s1243 = smul.addr %s1242, 8
      %s1244 = scalar_lea.vmem %s8, %s1243
      %p1245 = scmp.lt.s32.totalorder %s25, 0
      %s1246 = scalar_select %p1245, %s25, 0
      %s1247 = smul.addr %s1246, 8
      %s1248 = scalar_lea.vmem %s9, %s1247
      // Predicated region
      $region57: #{rnn_compartment_forward.1} parent=47 // pred_check
        %p1249 = pneg %p207
      $region58: #{rnn_compartment_forward.1} parent=47 // pred_check_branch
        %1251 = sbr.rel (%p1249) target = $region60
      $region59: #{rnn_compartment_forward.1} parent=47 // pred_region
        %s1252 = smul.u32 4, %s26
      $region60: #{rnn_compartment_forward.1} parent=47 // pred_fallthru
        _
      // Predicated region
      $region61: #{rnn_compartment_forward.1} parent=47 // pred_check
        %p1253 = pneg %p233
      $region62: #{rnn_compartment_forward.1} parent=47 // pred_check_branch
        %1255 = sbr.rel (%p1253) target = $region64
      $region63: #{rnn_compartment_forward.1} parent=47 // pred_region
        _
      $region64: #{rnn_compartment_forward.1} parent=47 // pred_fallthru
        _
      // Predicated region
      $region65: #{rnn_compartment_forward.1} parent=47 // pred_check
        %p1256 = pneg %p259
      $region66: #{rnn_compartment_forward.1} parent=47 // pred_check_branch
        %1258 = sbr.rel (%p1256) target = $region68
      $region67: #{rnn_compartment_forward.1} parent=47 // pred_region
        _
      $region68: #{rnn_compartment_forward.1} parent=47 // pred_fallthru
        _
      // Predicated region
      $region69: #{rnn_compartment_forward.1} parent=47 // pred_check
        %p1259 = pneg %p233
      $region70: #{rnn_compartment_forward.1} parent=47 // pred_check_branch
        %1261 = sbr.rel (%p1259) target = $region72
      $region71: #{rnn_compartment_forward.1} parent=47 // pred_region
        %p1262 = scmp.lt.s32.totalorder %s25, 0
        %s1263 = scalar_select %p1262, %s25, 0
        %s1264 = smul.addr %s1263, 8
        %s1265 = scalar_lea.vmem %s8, %s1264
      $region72: #{rnn_compartment_forward.1} parent=47 // pred_fallthru
        _
      // Predicated region
      $region73: #{rnn_compartment_forward.1} parent=47 // pred_check
        %p1266 = pneg %p259
      $region74: #{rnn_compartment_forward.1} parent=47 // pred_check_branch
        %1268 = sbr.rel (%p1266) target = $region76
      $region75: #{rnn_compartment_forward.1} parent=47 // pred_region
        %p1269 = scmp.lt.s32.totalorder %s25, 0
        %s1270 = scalar_select %p1269, %s25, 0
        %s1271 = smul.addr %s1270, 8
        %s1272 = scalar_lea.vmem %s9, %s1271
      $region76: #{rnn_compartment_forward.1} parent=47 // pred_fallthru
        _
    $region48: #{rnn_compartment_forward.1} parent=5 // pred_fallthru
      _
    %p1273 = scmp.le.s32.totalorder 2, %s16
    // Predicated region
    $region77: #{rnn_compartment_forward.1} parent=5 // pred_check
      %p1274 = pneg %p1273
    $region78: #{rnn_compartment_forward.1} parent=5 // pred_check_branch
      %1276 = sbr.rel (%p1274) target = $region80
    $region79: #{rnn_compartment_forward.1} parent=5 // pred_region
      %s1277 = ssub.s32 %s16, 2
      // Predicated region
      $region81: #{rnn_compartment_forward.1} parent=79 // pred_check
        %p1278 = pneg %p213
      $region82: #{rnn_compartment_forward.1} parent=79 // pred_check_branch
        %1280 = sbr.rel (%p1278) target = $region84
      $region83: #{rnn_compartment_forward.1} parent=79 // pred_region
        %s1281 = smul.u32 4, %s28
        %p1282 = scmp.lt.s32.totalorder %s1281, 7
        %s1283 = scalar_select %p1282, %s1281, 7
        %p1284 = scmp.lt.s32.totalorder %s27, 0
        %s1285 = scalar_select %p1284, %s27, 0
        %s1286 = sadd.s32 %s1285, %s1283
        %s1287 = smul.addr %s1286, 8
        %s1288 = scalar_lea.vmem %s7, %s1287
      $region84: #{rnn_compartment_forward.1} parent=79 // pred_fallthru
        _
    $region80: #{rnn_compartment_forward.1} parent=5 // pred_fallthru
      _
  $region6: #{rnn_compartment_forward.1} parent=0 // loop_footer
    %s20 = sadd.s32 1, %s16
  $region7: #{rnn_compartment_forward.1} parent=0 // loop_footer_branch
    %15 = sbr.rel target = $region3
  $region8: #{rnn_compartment_forward.1} parent=0 // loop_exit
    _

</llo_original>
